<compile_context>
chip_gen: v5e
topology: v5e:2x2
jax: 0.10.0
libtpu: 0.0.40
codegen_flags: <defaults>
</compile_context>

<pallas_src>
import jax
import jax.numpy as jnp
from jax import lax
from jax.experimental import pallas as pl
from jax.experimental.pallas import tpu as pltpu


def _mul_conv1x1_kernel(x_ref, s_ref, w_ref, o_ref):
    # x_ref: (Cin, HW)        f32 activations
    # s_ref: (1, Cin)         f32 per-channel scale (lane-major row)
    # w_ref: (Cout_blk, Cin)  bf16 1x1 conv weight block
    # o_ref: (Cout_blk, HW)   f32 output block
    # Fold the per-channel scale into the weight (same result as scaling x).
    # Multiply in f32 on the VPU (v5e has no bf16 VPU), cast to bf16 for MXU.
    ws = (w_ref[...].astype(jnp.float32) * s_ref[...]).astype(jnp.bfloat16)
    xb = x_ref[...].astype(jnp.bfloat16)
    o_ref[...] = lax.dot_general(
        ws, xb,
        dimension_numbers=(((1,), (0,)), ((), ())),   # (Cout,Cin) @ (Cin,HW)
        preferred_element_type=jnp.float32,           # f32 accumulation
    ).astype(o_ref.dtype)


def prepare_conv1x1_weight(weight_oihw):
    """One-time (init-time) weight prep: (Cout, Cin, 1, 1) f32 -> (Cout, Cin) bf16."""
    cout, cin = weight_oihw.shape[0], weight_oihw.shape[1]
    return weight_oihw.reshape(cout, cin).astype(jnp.bfloat16)


def _num_cout_blocks(cout):
    # Split Cout across both TensorCores only on multi-TC chips (v7x); a grid
    # split on 1-TC chips (v5e/v6e) is pure per-step overhead.
    try:
        kind = jax.devices()[0].device_kind.lower()
    except Exception:
        return 1
    if "v7" in kind and cout % 16 == 0:
        return 2
    return 1


def mul_conv1x1(x_nchw, scale_nc11, w2d_bf16):
    """x: (1, Cin, H, W) f32, scale: (1, Cin, 1, 1) f32, weight: (Cout, Cin) bf16."""
    n, cin, h, w = x_nchw.shape
    cout = w2d_bf16.shape[0]
    assert n == 1, "kernel written for batch=1 (matches the reference module)"
    hw = h * w

    x2d = x_nchw.reshape(cin, hw)       # free reshape (NCHW-contiguous)
    s2d = scale_nc11.reshape(1, cin)    # free reshape, lane-major scale row

    nblk = _num_cout_blocks(cout)
    cout_blk = cout // nblk

    flops = 2 * cout * cin * hw
    bytes_accessed = (x2d.size * 4) + (s2d.size * 4) + (w2d_bf16.size * 2) + (cout * hw * 4)

    out2d = pl.pallas_call(
        _mul_conv1x1_kernel,
        out_shape=jax.ShapeDtypeStruct((cout, hw), x_nchw.dtype),
        grid=(nblk,),
        in_specs=[
            pl.BlockSpec((cin, hw), lambda i: (0, 0)),         # x replicated
            pl.BlockSpec((1, cin), lambda i: (0, 0)),          # scale replicated
            pl.BlockSpec((cout_blk, cin), lambda i: (i, 0)),   # weight split on Cout
        ],
        out_specs=pl.BlockSpec((cout_blk, hw), lambda i: (i, 0)),
        compiler_params=pltpu.CompilerParams(
            dimension_semantics=("parallel",)),
        cost_estimate=pl.CostEstimate(
            flops=flops, transcendentals=0, bytes_accessed=bytes_accessed),
    )(x2d, s2d, w2d_bf16)

    # (Cout, HW) -> (1, Cout, H, W): pure reshape, no transpose.
    return out2d.reshape(1, cout, h, w)


if __name__ == "__main__":
    key = jax.random.PRNGKey(0)
    k1, k2, k3 = jax.random.split(key, 3)

    N, CIN, H, W = 1, 1056, 7, 7
    COUT = 304

    x403 = jax.random.normal(k1, (N, CIN, H, W), dtype=jnp.float32)
    x408 = jax.random.normal(k2, (N, CIN, 1, 1), dtype=jnp.float32)
    # Conv2d(1056, 304, kernel_size=1, bias=False) weight
    weight = jax.random.normal(k3, (COUT, CIN, 1, 1), dtype=jnp.float32) * 0.02

    # One-time parameter preparation (init time, NOT a per-call wrapper op).
    w2d_bf16 = jax.block_until_ready(prepare_conv1x1_weight(weight))

    out = mul_conv1x1(x403, x408, w2d_bf16)
    out = jax.block_until_ready(out)
    assert out.shape == (N, COUT, H, W)

    # Reference 1: identical bf16-operand rounding path in plain JAX (tight tol).
    w_r = weight.reshape(COUT, CIN).astype(jnp.bfloat16).astype(jnp.float32)
    ws_r = (w_r * x408.reshape(1, CIN)).astype(jnp.bfloat16).astype(jnp.float32)
    x_r = x403.reshape(CIN, H * W).astype(jnp.bfloat16).astype(jnp.float32)
    ref_bf16 = jnp.dot(ws_r, x_r, precision=lax.Precision.HIGHEST).reshape(1, COUT, H, W)
    assert jnp.allclose(out, ref_bf16, atol=1e-3, rtol=1e-3)

    # Reference 2: full f32 reference (loose tolerance; bf16 MXU operands).
    ref_f32 = jnp.einsum("oc,nchw->nohw", weight.reshape(COUT, CIN), x403 * x408)
    assert jnp.allclose(out, ref_f32, atol=5e-2, rtol=5e-2)

    print("KERNEL_OK")
</pallas_src>

<mosaic_0001>
module attributes {stable_mosaic.version = 11 : i64} {
  func.func @_mul_conv1x1_kernel(%arg0: i32, %arg1: memref<1056x49xf32, #tpu.memory_space<vmem>>, %arg2: memref<1x1056xf32, #tpu.memory_space<vmem>>, %arg3: memref<304x1056xbf16, #tpu.memory_space<vmem>>, %arg4: memref<304x49xf32, #tpu.memory_space<vmem>>) attributes {dimension_semantics = [#tpu.dimension_semantics<parallel>], iteration_bounds = array<i64: 1>, scalar_prefetch = 0 : i64, scratch_operands = 0 : i64, tpu.core_type = #tpu.core_type<tc>, window_params = [{pipeline_mode = #tpu.pipeline_mode<synchronous>, transform_indices = @transform_0, window_bounds = array<i64: 1056, 49>}, {pipeline_mode = #tpu.pipeline_mode<synchronous>, transform_indices = @transform_1, window_bounds = array<i64: 1, 1056>}, {transform_indices = @transform_2, window_bounds = array<i64: 304, 1056>}, {transform_indices = @transform_3, window_bounds = array<i64: 304, 49>}]} {
    %c0 = arith.constant 0 : index
    %c0_0 = arith.constant 0 : index
    %0 = vector.load %arg3[%c0, %c0_0] : memref<304x1056xbf16, #tpu.memory_space<vmem>>, vector<304x1056xbf16>
    %1 = arith.extf %0 : vector<304x1056xbf16> to vector<304x1056xf32>
    %c0_1 = arith.constant 0 : index
    %c0_2 = arith.constant 0 : index
    %2 = vector.load %arg2[%c0_1, %c0_2] : memref<1x1056xf32, #tpu.memory_space<vmem>>, vector<1x1056xf32>
    %3 = vector.broadcast %2 : vector<1x1056xf32> to vector<304x1056xf32>
    %4 = arith.mulf %1, %3 : vector<304x1056xf32>
    %5 = arith.truncf %4 : vector<304x1056xf32> to vector<304x1056xbf16>
    %c0_3 = arith.constant 0 : index
    %c0_4 = arith.constant 0 : index
    %6 = vector.load %arg1[%c0_3, %c0_4] : memref<1056x49xf32, #tpu.memory_space<vmem>>, vector<1056x49xf32>
    %7 = arith.truncf %6 : vector<1056x49xf32> to vector<1056x49xbf16>
    %cst = arith.constant dense<0.000000e+00> : vector<304x49xf32>
    %8 = tpu.matmul %5, %7, %cst {dimension_numbers = #tpu.dot_dimension_numbers<[1], [0], [0], [1], [0, 0, 1, 1], [], []>} : vector<304x1056xbf16>, vector<1056x49xbf16>, vector<304x49xf32> -> vector<304x49xf32>
    %c0_5 = arith.constant 0 : index
    %c0_6 = arith.constant 0 : index
    %9 = vector.load %arg4[%c0_5, %c0_6] : memref<304x49xf32, #tpu.memory_space<vmem>>, vector<304x49xf32>
    tpu.vector_store %arg4[%c0_5, %c0_6], %8 {strides = array<i32>} : memref<304x49xf32, #tpu.memory_space<vmem>>, vector<304x49xf32>,
    return
  }
  func.func @transform_0(%arg0: i32) -> (i32, i32) {
    %c0_i32 = arith.constant 0 : i32
    %c0_i32_0 = arith.constant 0 : i32
    %c0_i32_1 = arith.constant 0 : i32
    return %c0_i32, %c0_i32_0 : i32, i32
  }
  func.func @transform_1(%arg0: i32) -> (i32, i32) {
    %c0_i32 = arith.constant 0 : i32
    %c0_i32_0 = arith.constant 0 : i32
    %c0_i32_1 = arith.constant 0 : i32
    return %c0_i32, %c0_i32_0 : i32, i32
  }
  func.func @transform_2(%arg0: i32) -> (i32, i32) {
    %c0_i32 = arith.constant 0 : i32
    %c0_i32_0 = arith.constant 0 : i32
    return %arg0, %c0_i32 : i32, i32
  }
  func.func @transform_3(%arg0: i32) -> (i32, i32) {
    %c0_i32 = arith.constant 0 : i32
    %c0_i32_0 = arith.constant 0 : i32
    return %arg0, %c0_i32 : i32, i32
  }
}

</mosaic_0001>

<llo_original>
// kernel: tpu_custom_call.1
$region0: #{tpu_custom_call.1}
  #allocation0 [shape = 'u32[]', space=smem, size = 0x4, offset = 0x4, fixed_abs, tag = 'smem constant byte address 0x4 - core index']
  #allocation1 [shape = 'u32[72,128]{1,0:T(1,128)}', space=vmem, size = 0x9000, scoped, tag = 'internal scratch']
  %s0 = inlined_call_operand.vmem [shape: f32[1056,49], index: 0, kind: input, shape index: {}]
  %s1 = inlined_call_operand.vmem [shape: f32[1,1056], index: 1, kind: input, shape index: {}]
  %s2 = inlined_call_operand.vmem [shape: bf16[304,1056], index: 2, kind: input, shape index: {}]
  %s3 = inlined_call_operand.vmem [shape: f32[304,49], index: 3, kind: output, shape index: {}]
  %s4 = sld [smem:[#allocation0]]
  $region22: #{tpu_custom_call.1} parent=0
    _
  %s6 = ssub.s32 1, %s4
  %s7 = scalar_select 0, %s6, %s4
  // Predicated region
  $region2: #{tpu_custom_call.1} parent=0 // pred_check
    _
  $region3: #{tpu_custom_call.1} parent=0 // pred_check_branch
    %9 = sbr.rel (0) target = $region5
  $region4: #{tpu_custom_call.1} parent=0 // pred_region
    _
  $region5: #{tpu_custom_call.1} parent=0 // pred_fallthru
    _
  // Predicated region
  $region6: #{tpu_custom_call.1} parent=0 // pred_check
    _
  $region7: #{tpu_custom_call.1} parent=0 // pred_check_branch
    %11 = sbr.rel (0) target = $region9
  $region8: #{tpu_custom_call.1} parent=0 // pred_region
    _
  $region9: #{tpu_custom_call.1} parent=0 // pred_fallthru
    _
  // Predicated region
  $region10: #{tpu_custom_call.1} parent=0 // pred_check
    _
  $region11: #{tpu_custom_call.1} parent=0 // pred_check_branch
    %13 = sbr.rel (0) target = $region13
  $region12: #{tpu_custom_call.1} parent=0 // pred_region
    _
  $region13: #{tpu_custom_call.1} parent=0 // pred_fallthru
    _
  %v15 = vld [vmem:[%s2] sm:$0xff]
  %v16 = vld [vmem:[%s2 + $0x8] sm:$0xff]
  %v17 = vld [vmem:[%s2 + $0x10] sm:$0xff]
  %v18 = vld [vmem:[%s2 + $0x18] sm:$0xff]
  %v19 = vld [vmem:[%s2 + $0x20] sm:$0xf]
  %v20 = vld [vmem:[%s2 + $0x24] sm:$0xff]
  %v21 = vld [vmem:[%s2 + $0x2c] sm:$0xff]
  %v22 = vld [vmem:[%s2 + $0x34] sm:$0xff]
  %v23 = vld [vmem:[%s2 + $0x3c] sm:$0xff]
  %v24 = vld [vmem:[%s2 + $0x44] sm:$0xf]
  %v25 = vld [vmem:[%s2 + $0x48] sm:$0xff]
  %v26 = vld [vmem:[%s2 + $0x50] sm:$0xff]
  %v27 = vld [vmem:[%s2 + $0x58] sm:$0xff]
  %v28 = vld [vmem:[%s2 + $0x60] sm:$0xff]
  %v29 = vld [vmem:[%s2 + $0x68] sm:$0xf]
  %v30 = vld [vmem:[%s2 + $0x6c] sm:$0xff]
  %v31 = vld [vmem:[%s2 + $0x74] sm:$0xff]
  %v32 = vld [vmem:[%s2 + $0x7c] sm:$0xff]
  %v33 = vld [vmem:[%s2 + $0x84] sm:$0xff]
  %v34 = vld [vmem:[%s2 + $0x8c] sm:$0xf]
  %v35 = vld [vmem:[%s2 + $0x90] sm:$0xff]
  %v36 = vld [vmem:[%s2 + $0x98] sm:$0xff]
  %v37 = vld [vmem:[%s2 + $0xa0] sm:$0xff]
  %v38 = vld [vmem:[%s2 + $0xa8] sm:$0xff]
  %v39 = vld [vmem:[%s2 + $0xb0] sm:$0xf]
  %v40 = vld [vmem:[%s2 + $0xb4] sm:$0xff]
  %v41 = vld [vmem:[%s2 + $0xbc] sm:$0xff]
  %v42 = vld [vmem:[%s2 + $0xc4] sm:$0xff]
  %v43 = vld [vmem:[%s2 + $0xcc] sm:$0xff]
  %v44 = vld [vmem:[%s2 + $0xd4] sm:$0xf]
  %v45 = vld [vmem:[%s2 + $0xd8] sm:$0xff]
  %v46 = vld [vmem:[%s2 + $0xe0] sm:$0xff]
  %v47 = vld [vmem:[%s2 + $0xe8] sm:$0xff]
  %v48 = vld [vmem:[%s2 + $0xf0] sm:$0xff]
  %v49 = vld [vmem:[%s2 + $0xf8] sm:$0xf]
  %v50 = vld [vmem:[%s2 + $0xfc] sm:$0xff]
  %v51 = vld [vmem:[%s2 + $0x104] sm:$0xff]
  %v52 = vld [vmem:[%s2 + $0x10c] sm:$0xff]
  %v53 = vld [vmem:[%s2 + $0x114] sm:$0xff]
  %v54 = vld [vmem:[%s2 + $0x11c] sm:$0xf]
  %v55 = vld [vmem:[%s2 + $0x120] sm:$0xff]
  %v56 = vld [vmem:[%s2 + $0x128] sm:$0xff]
  %v57 = vld [vmem:[%s2 + $0x130] sm:$0xff]
  %v58 = vld [vmem:[%s2 + $0x138] sm:$0xff]
  %v59 = vld [vmem:[%s2 + $0x140] sm:$0xf]
  %v60 = vld [vmem:[%s2 + $0x144] sm:$0xff]
  %v61 = vld [vmem:[%s2 + $0x14c] sm:$0xff]
  %v62 = vld [vmem:[%s2 + $0x154] sm:$0xff]
  %v63 = vld [vmem:[%s2 + $0x15c] sm:$0xff]
  %v64 = vld [vmem:[%s2 + $0x164] sm:$0xf]
  %v65 = vld [vmem:[%s2 + $0x168] sm:$0xff]
  %v66 = vld [vmem:[%s2 + $0x170] sm:$0xff]
  %v67 = vld [vmem:[%s2 + $0x178] sm:$0xff]
  %v68 = vld [vmem:[%s2 + $0x180] sm:$0xff]
  %v69 = vld [vmem:[%s2 + $0x188] sm:$0xf]
  %v70 = vld [vmem:[%s2 + $0x18c] sm:$0xff]
  %v71 = vld [vmem:[%s2 + $0x194] sm:$0xff]
  %v72 = vld [vmem:[%s2 + $0x19c] sm:$0xff]
  %v73 = vld [vmem:[%s2 + $0x1a4] sm:$0xff]
  %v74 = vld [vmem:[%s2 + $0x1ac] sm:$0xf]
  %v75 = vld [vmem:[%s2 + $0x1b0] sm:$0xff]
  %v76 = vld [vmem:[%s2 + $0x1b8] sm:$0xff]
  %v77 = vld [vmem:[%s2 + $0x1c0] sm:$0xff]
  %v78 = vld [vmem:[%s2 + $0x1c8] sm:$0xff]
  %v79 = vld [vmem:[%s2 + $0x1d0] sm:$0xf]
  %v80 = vld [vmem:[%s2 + $0x1d4] sm:$0xff]
  %v81 = vld [vmem:[%s2 + $0x1dc] sm:$0xff]
  %v82 = vld [vmem:[%s2 + $0x1e4] sm:$0xff]
  %v83 = vld [vmem:[%s2 + $0x1ec] sm:$0xff]
  %v84 = vld [vmem:[%s2 + $0x1f4] sm:$0xf]
  %v85 = vld [vmem:[%s2 + $0x1f8] sm:$0xff]
  %v86 = vld [vmem:[%s2 + $0x200] sm:$0xff]
  %v87 = vld [vmem:[%s2 + $0x208] sm:$0xff]
  %v88 = vld [vmem:[%s2 + $0x210] sm:$0xff]
  %v89 = vld [vmem:[%s2 + $0x218] sm:$0xf]
  %v90 = vld [vmem:[%s2 + $0x21c] sm:$0xff]
  %v91 = vld [vmem:[%s2 + $0x224] sm:$0xff]
  %v92 = vld [vmem:[%s2 + $0x22c] sm:$0xff]
  %v93 = vld [vmem:[%s2 + $0x234] sm:$0xff]
  %v94 = vld [vmem:[%s2 + $0x23c] sm:$0xf]
  %v95 = vld [vmem:[%s2 + $0x240] sm:$0xff]
  %v96 = vld [vmem:[%s2 + $0x248] sm:$0xff]
  %v97 = vld [vmem:[%s2 + $0x250] sm:$0xff]
  %v98 = vld [vmem:[%s2 + $0x258] sm:$0xff]
  %v99 = vld [vmem:[%s2 + $0x260] sm:$0xf]
  %v100 = vld [vmem:[%s2 + $0x264] sm:$0xff]
  %v101 = vld [vmem:[%s2 + $0x26c] sm:$0xff]
  %v102 = vld [vmem:[%s2 + $0x274] sm:$0xff]
  %v103 = vld [vmem:[%s2 + $0x27c] sm:$0xff]
  %v104 = vld [vmem:[%s2 + $0x284] sm:$0xf]
  %v105 = vld [vmem:[%s2 + $0x288] sm:$0xff]
  %v106 = vld [vmem:[%s2 + $0x290] sm:$0xff]
  %v107 = vld [vmem:[%s2 + $0x298] sm:$0xff]
  %v108 = vld [vmem:[%s2 + $0x2a0] sm:$0xff]
  %v109 = vld [vmem:[%s2 + $0x2a8] sm:$0xf]
  %v110 = vld [vmem:[%s2 + $0x2ac] sm:$0xff]
  %v111 = vld [vmem:[%s2 + $0x2b4] sm:$0xff]
  %v112 = vld [vmem:[%s2 + $0x2bc] sm:$0xff]
  %v113 = vld [vmem:[%s2 + $0x2c4] sm:$0xff]
  %v114 = vld [vmem:[%s2 + $0x2cc] sm:$0xf]
  %v115 = vld [vmem:[%s2 + $0x2d0] sm:$0xff]
  %v116 = vld [vmem:[%s2 + $0x2d8] sm:$0xff]
  %v117 = vld [vmem:[%s2 + $0x2e0] sm:$0xff]
  %v118 = vld [vmem:[%s2 + $0x2e8] sm:$0xff]
  %v119 = vld [vmem:[%s2 + $0x2f0] sm:$0xf]
  %v120 = vld [vmem:[%s2 + $0x2f4] sm:$0xff]
  %v121 = vld [vmem:[%s2 + $0x2fc] sm:$0xff]
  %v122 = vld [vmem:[%s2 + $0x304] sm:$0xff]
  %v123 = vld [vmem:[%s2 + $0x30c] sm:$0xff]
  %v124 = vld [vmem:[%s2 + $0x314] sm:$0xf]
  %v125 = vld [vmem:[%s2 + $0x318] sm:$0xff]
  %v126 = vld [vmem:[%s2 + $0x320] sm:$0xff]
  %v127 = vld [vmem:[%s2 + $0x328] sm:$0xff]
  %v128 = vld [vmem:[%s2 + $0x330] sm:$0xff]
  %v129 = vld [vmem:[%s2 + $0x338] sm:$0xf]
  %v130 = vld [vmem:[%s2 + $0x33c] sm:$0xff]
  %v131 = vld [vmem:[%s2 + $0x344] sm:$0xff]
  %v132 = vld [vmem:[%s2 + $0x34c] sm:$0xff]
  %v133 = vld [vmem:[%s2 + $0x354] sm:$0xff]
  %v134 = vld [vmem:[%s2 + $0x35c] sm:$0xf]
  %v135 = vld [vmem:[%s2 + $0x360] sm:$0xff]
  %v136 = vld [vmem:[%s2 + $0x368] sm:$0xff]
  %v137 = vld [vmem:[%s2 + $0x370] sm:$0xff]
  %v138 = vld [vmem:[%s2 + $0x378] sm:$0xff]
  %v139 = vld [vmem:[%s2 + $0x380] sm:$0xf]
  %v140 = vld [vmem:[%s2 + $0x384] sm:$0xff]
  %v141 = vld [vmem:[%s2 + $0x38c] sm:$0xff]
  %v142 = vld [vmem:[%s2 + $0x394] sm:$0xff]
  %v143 = vld [vmem:[%s2 + $0x39c] sm:$0xff]
  %v144 = vld [vmem:[%s2 + $0x3a4] sm:$0xf]
  %v145 = vld [vmem:[%s2 + $0x3a8] sm:$0xff]
  %v146 = vld [vmem:[%s2 + $0x3b0] sm:$0xff]
  %v147 = vld [vmem:[%s2 + $0x3b8] sm:$0xff]
  %v148 = vld [vmem:[%s2 + $0x3c0] sm:$0xff]
  %v149 = vld [vmem:[%s2 + $0x3c8] sm:$0xf]
  %v150 = vld [vmem:[%s2 + $0x3cc] sm:$0xff]
  %v151 = vld [vmem:[%s2 + $0x3d4] sm:$0xff]
  %v152 = vld [vmem:[%s2 + $0x3dc] sm:$0xff]
  %v153 = vld [vmem:[%s2 + $0x3e4] sm:$0xff]
  %v154 = vld [vmem:[%s2 + $0x3ec] sm:$0xf]
  %v155 = vld [vmem:[%s2 + $0x3f0] sm:$0xff]
  %v156 = vld [vmem:[%s2 + $0x3f8] sm:$0xff]
  %v157 = vld [vmem:[%s2 + $0x400] sm:$0xff]
  %v158 = vld [vmem:[%s2 + $0x408] sm:$0xff]
  %v159 = vld [vmem:[%s2 + $0x410] sm:$0xf]
  %v160 = vld [vmem:[%s2 + $0x414] sm:$0xff]
  %v161 = vld [vmem:[%s2 + $0x41c] sm:$0xff]
  %v162 = vld [vmem:[%s2 + $0x424] sm:$0xff]
  %v163 = vld [vmem:[%s2 + $0x42c] sm:$0xff]
  %v164 = vld [vmem:[%s2 + $0x434] sm:$0xf]
  %v165 = vld [vmem:[%s2 + $0x438] sm:$0xff]
  %v166 = vld [vmem:[%s2 + $0x440] sm:$0xff]
  %v167 = vld [vmem:[%s2 + $0x448] sm:$0xff]
  %v168 = vld [vmem:[%s2 + $0x450] sm:$0xff]
  %v169 = vld [vmem:[%s2 + $0x458] sm:$0xf]
  %v170 = vld [vmem:[%s2 + $0x45c] sm:$0xff]
  %v171 = vld [vmem:[%s2 + $0x464] sm:$0xff]
  %v172 = vld [vmem:[%s2 + $0x46c] sm:$0xff]
  %v173 = vld [vmem:[%s2 + $0x474] sm:$0xff]
  %v174 = vld [vmem:[%s2 + $0x47c] sm:$0xf]
  %v175 = vld [vmem:[%s2 + $0x480] sm:$0xff]
  %v176 = vld [vmem:[%s2 + $0x488] sm:$0xff]
  %v177 = vld [vmem:[%s2 + $0x490] sm:$0xff]
  %v178 = vld [vmem:[%s2 + $0x498] sm:$0xff]
  %v179 = vld [vmem:[%s2 + $0x4a0] sm:$0xf]
  %v180 = vld [vmem:[%s2 + $0x4a4] sm:$0xff]
  %v181 = vld [vmem:[%s2 + $0x4ac] sm:$0xff]
  %v182 = vld [vmem:[%s2 + $0x4b4] sm:$0xff]
  %v183 = vld [vmem:[%s2 + $0x4bc] sm:$0xff]
  %v184 = vld [vmem:[%s2 + $0x4c4] sm:$0xf]
  %v185 = vld [vmem:[%s2 + $0x4c8] sm:$0xff]
  %v186 = vld [vmem:[%s2 + $0x4d0] sm:$0xff]
  %v187 = vld [vmem:[%s2 + $0x4d8] sm:$0xff]
  %v188 = vld [vmem:[%s2 + $0x4e0] sm:$0xff]
  %v189 = vld [vmem:[%s2 + $0x4e8] sm:$0xf]
  %v190 = vld [vmem:[%s2 + $0x4ec] sm:$0xff]
  %v191 = vld [vmem:[%s2 + $0x4f4] sm:$0xff]
  %v192 = vld [vmem:[%s2 + $0x4fc] sm:$0xff]
  %v193 = vld [vmem:[%s2 + $0x504] sm:$0xff]
  %v194 = vld [vmem:[%s2 + $0x50c] sm:$0xf]
  %v195 = vld [vmem:[%s2 + $0x510] sm:$0xff]
  %v196 = vld [vmem:[%s2 + $0x518] sm:$0xff]
  %v197 = vld [vmem:[%s2 + $0x520] sm:$0xff]
  %v198 = vld [vmem:[%s2 + $0x528] sm:$0xff]
  %v199 = vld [vmem:[%s2 + $0x530] sm:$0xf]
  %v200 = vld [vmem:[%s2 + $0x534] sm:$0xff]
  %v201 = vld [vmem:[%s2 + $0x53c] sm:$0xff]
  %v202 = vld [vmem:[%s2 + $0x544] sm:$0xff]
  %v203 = vld [vmem:[%s2 + $0x54c] sm:$0xff]
  %v204 = vld [vmem:[%s2 + $0x554] sm:$0xf]
  %v205 = vunpack.c.l.bf16 %v15
  %v206 = vunpack.c.h.bf16 %v15
  %v207 = vunpack.c.l.bf16 %v16
  %v208 = vunpack.c.h.bf16 %v16
  %v209 = vunpack.c.l.bf16 %v17
  %v210 = vunpack.c.h.bf16 %v17
  %v211 = vunpack.c.l.bf16 %v18
  %v212 = vunpack.c.h.bf16 %v18
  %v213 = vunpack.c.l.bf16 %v19
  %v214 = vunpack.c.l.bf16 %v20
  %v215 = vunpack.c.h.bf16 %v20
  %v216 = vunpack.c.l.bf16 %v21
  %v217 = vunpack.c.h.bf16 %v21
  %v218 = vunpack.c.l.bf16 %v22
  %v219 = vunpack.c.h.bf16 %v22
  %v220 = vunpack.c.l.bf16 %v23
  %v221 = vunpack.c.h.bf16 %v23
  %v222 = vunpack.c.l.bf16 %v24
  %v223 = vunpack.c.l.bf16 %v25
  %v224 = vunpack.c.h.bf16 %v25
  %v225 = vunpack.c.l.bf16 %v26
  %v226 = vunpack.c.h.bf16 %v26
  %v227 = vunpack.c.l.bf16 %v27
  %v228 = vunpack.c.h.bf16 %v27
  %v229 = vunpack.c.l.bf16 %v28
  %v230 = vunpack.c.h.bf16 %v28
  %v231 = vunpack.c.l.bf16 %v29
  %v232 = vunpack.c.l.bf16 %v30
  %v233 = vunpack.c.h.bf16 %v30
  %v234 = vunpack.c.l.bf16 %v31
  %v235 = vunpack.c.h.bf16 %v31
  %v236 = vunpack.c.l.bf16 %v32
  %v237 = vunpack.c.h.bf16 %v32
  %v238 = vunpack.c.l.bf16 %v33
  %v239 = vunpack.c.h.bf16 %v33
  %v240 = vunpack.c.l.bf16 %v34
  %v241 = vunpack.c.l.bf16 %v35
  %v242 = vunpack.c.h.bf16 %v35
  %v243 = vunpack.c.l.bf16 %v36
  %v244 = vunpack.c.h.bf16 %v36
  %v245 = vunpack.c.l.bf16 %v37
  %v246 = vunpack.c.h.bf16 %v37
  %v247 = vunpack.c.l.bf16 %v38
  %v248 = vunpack.c.h.bf16 %v38
  %v249 = vunpack.c.l.bf16 %v39
  %v250 = vunpack.c.l.bf16 %v40
  %v251 = vunpack.c.h.bf16 %v40
  %v252 = vunpack.c.l.bf16 %v41
  %v253 = vunpack.c.h.bf16 %v41
  %v254 = vunpack.c.l.bf16 %v42
  %v255 = vunpack.c.h.bf16 %v42
  %v256 = vunpack.c.l.bf16 %v43
  %v257 = vunpack.c.h.bf16 %v43
  %v258 = vunpack.c.l.bf16 %v44
  %v259 = vunpack.c.l.bf16 %v45
  %v260 = vunpack.c.h.bf16 %v45
  %v261 = vunpack.c.l.bf16 %v46
  %v262 = vunpack.c.h.bf16 %v46
  %v263 = vunpack.c.l.bf16 %v47
  %v264 = vunpack.c.h.bf16 %v47
  %v265 = vunpack.c.l.bf16 %v48
  %v266 = vunpack.c.h.bf16 %v48
  %v267 = vunpack.c.l.bf16 %v49
  %v268 = vunpack.c.l.bf16 %v50
  %v269 = vunpack.c.h.bf16 %v50
  %v270 = vunpack.c.l.bf16 %v51
  %v271 = vunpack.c.h.bf16 %v51
  %v272 = vunpack.c.l.bf16 %v52
  %v273 = vunpack.c.h.bf16 %v52
  %v274 = vunpack.c.l.bf16 %v53
  %v275 = vunpack.c.h.bf16 %v53
  %v276 = vunpack.c.l.bf16 %v54
  %v277 = vunpack.c.l.bf16 %v55
  %v278 = vunpack.c.h.bf16 %v55
  %v279 = vunpack.c.l.bf16 %v56
  %v280 = vunpack.c.h.bf16 %v56
  %v281 = vunpack.c.l.bf16 %v57
  %v282 = vunpack.c.h.bf16 %v57
  %v283 = vunpack.c.l.bf16 %v58
  %v284 = vunpack.c.h.bf16 %v58
  %v285 = vunpack.c.l.bf16 %v59
  %v286 = vunpack.c.l.bf16 %v60
  %v287 = vunpack.c.h.bf16 %v60
  %v288 = vunpack.c.l.bf16 %v61
  %v289 = vunpack.c.h.bf16 %v61
  %v290 = vunpack.c.l.bf16 %v62
  %v291 = vunpack.c.h.bf16 %v62
  %v292 = vunpack.c.l.bf16 %v63
  %v293 = vunpack.c.h.bf16 %v63
  %v294 = vunpack.c.l.bf16 %v64
  %v295 = vunpack.c.l.bf16 %v65
  %v296 = vunpack.c.h.bf16 %v65
  %v297 = vunpack.c.l.bf16 %v66
  %v298 = vunpack.c.h.bf16 %v66
  %v299 = vunpack.c.l.bf16 %v67
  %v300 = vunpack.c.h.bf16 %v67
  %v301 = vunpack.c.l.bf16 %v68
  %v302 = vunpack.c.h.bf16 %v68
  %v303 = vunpack.c.l.bf16 %v69
  %v304 = vunpack.c.l.bf16 %v70
  %v305 = vunpack.c.h.bf16 %v70
  %v306 = vunpack.c.l.bf16 %v71
  %v307 = vunpack.c.h.bf16 %v71
  %v308 = vunpack.c.l.bf16 %v72
  %v309 = vunpack.c.h.bf16 %v72
  %v310 = vunpack.c.l.bf16 %v73
  %v311 = vunpack.c.h.bf16 %v73
  %v312 = vunpack.c.l.bf16 %v74
  %v313 = vunpack.c.l.bf16 %v75
  %v314 = vunpack.c.h.bf16 %v75
  %v315 = vunpack.c.l.bf16 %v76
  %v316 = vunpack.c.h.bf16 %v76
  %v317 = vunpack.c.l.bf16 %v77
  %v318 = vunpack.c.h.bf16 %v77
  %v319 = vunpack.c.l.bf16 %v78
  %v320 = vunpack.c.h.bf16 %v78
  %v321 = vunpack.c.l.bf16 %v79
  %v322 = vunpack.c.l.bf16 %v80
  %v323 = vunpack.c.h.bf16 %v80
  %v324 = vunpack.c.l.bf16 %v81
  %v325 = vunpack.c.h.bf16 %v81
  %v326 = vunpack.c.l.bf16 %v82
  %v327 = vunpack.c.h.bf16 %v82
  %v328 = vunpack.c.l.bf16 %v83
  %v329 = vunpack.c.h.bf16 %v83
  %v330 = vunpack.c.l.bf16 %v84
  %v331 = vunpack.c.l.bf16 %v85
  %v332 = vunpack.c.h.bf16 %v85
  %v333 = vunpack.c.l.bf16 %v86
  %v334 = vunpack.c.h.bf16 %v86
  %v335 = vunpack.c.l.bf16 %v87
  %v336 = vunpack.c.h.bf16 %v87
  %v337 = vunpack.c.l.bf16 %v88
  %v338 = vunpack.c.h.bf16 %v88
  %v339 = vunpack.c.l.bf16 %v89
  %v340 = vunpack.c.l.bf16 %v90
  %v341 = vunpack.c.h.bf16 %v90
  %v342 = vunpack.c.l.bf16 %v91
  %v343 = vunpack.c.h.bf16 %v91
  %v344 = vunpack.c.l.bf16 %v92
  %v345 = vunpack.c.h.bf16 %v92
  %v346 = vunpack.c.l.bf16 %v93
  %v347 = vunpack.c.h.bf16 %v93
  %v348 = vunpack.c.l.bf16 %v94
  %v349 = vunpack.c.l.bf16 %v95
  %v350 = vunpack.c.h.bf16 %v95
  %v351 = vunpack.c.l.bf16 %v96
  %v352 = vunpack.c.h.bf16 %v96
  %v353 = vunpack.c.l.bf16 %v97
  %v354 = vunpack.c.h.bf16 %v97
  %v355 = vunpack.c.l.bf16 %v98
  %v356 = vunpack.c.h.bf16 %v98
  %v357 = vunpack.c.l.bf16 %v99
  %v358 = vunpack.c.l.bf16 %v100
  %v359 = vunpack.c.h.bf16 %v100
  %v360 = vunpack.c.l.bf16 %v101
  %v361 = vunpack.c.h.bf16 %v101
  %v362 = vunpack.c.l.bf16 %v102
  %v363 = vunpack.c.h.bf16 %v102
  %v364 = vunpack.c.l.bf16 %v103
  %v365 = vunpack.c.h.bf16 %v103
  %v366 = vunpack.c.l.bf16 %v104
  %v367 = vunpack.c.l.bf16 %v105
  %v368 = vunpack.c.h.bf16 %v105
  %v369 = vunpack.c.l.bf16 %v106
  %v370 = vunpack.c.h.bf16 %v106
  %v371 = vunpack.c.l.bf16 %v107
  %v372 = vunpack.c.h.bf16 %v107
  %v373 = vunpack.c.l.bf16 %v108
  %v374 = vunpack.c.h.bf16 %v108
  %v375 = vunpack.c.l.bf16 %v109
  %v376 = vunpack.c.l.bf16 %v110
  %v377 = vunpack.c.h.bf16 %v110
  %v378 = vunpack.c.l.bf16 %v111
  %v379 = vunpack.c.h.bf16 %v111
  %v380 = vunpack.c.l.bf16 %v112
  %v381 = vunpack.c.h.bf16 %v112
  %v382 = vunpack.c.l.bf16 %v113
  %v383 = vunpack.c.h.bf16 %v113
  %v384 = vunpack.c.l.bf16 %v114
  %v385 = vunpack.c.l.bf16 %v115
  %v386 = vunpack.c.h.bf16 %v115
  %v387 = vunpack.c.l.bf16 %v116
  %v388 = vunpack.c.h.bf16 %v116
  %v389 = vunpack.c.l.bf16 %v117
  %v390 = vunpack.c.h.bf16 %v117
  %v391 = vunpack.c.l.bf16 %v118
  %v392 = vunpack.c.h.bf16 %v118
  %v393 = vunpack.c.l.bf16 %v119
  %v394 = vunpack.c.l.bf16 %v120
  %v395 = vunpack.c.h.bf16 %v120
  %v396 = vunpack.c.l.bf16 %v121
  %v397 = vunpack.c.h.bf16 %v121
  %v398 = vunpack.c.l.bf16 %v122
  %v399 = vunpack.c.h.bf16 %v122
  %v400 = vunpack.c.l.bf16 %v123
  %v401 = vunpack.c.h.bf16 %v123
  %v402 = vunpack.c.l.bf16 %v124
  %v403 = vunpack.c.l.bf16 %v125
  %v404 = vunpack.c.h.bf16 %v125
  %v405 = vunpack.c.l.bf16 %v126
  %v406 = vunpack.c.h.bf16 %v126
  %v407 = vunpack.c.l.bf16 %v127
  %v408 = vunpack.c.h.bf16 %v127
  %v409 = vunpack.c.l.bf16 %v128
  %v410 = vunpack.c.h.bf16 %v128
  %v411 = vunpack.c.l.bf16 %v129
  %v412 = vunpack.c.l.bf16 %v130
  %v413 = vunpack.c.h.bf16 %v130
  %v414 = vunpack.c.l.bf16 %v131
  %v415 = vunpack.c.h.bf16 %v131
  %v416 = vunpack.c.l.bf16 %v132
  %v417 = vunpack.c.h.bf16 %v132
  %v418 = vunpack.c.l.bf16 %v133
  %v419 = vunpack.c.h.bf16 %v133
  %v420 = vunpack.c.l.bf16 %v134
  %v421 = vunpack.c.l.bf16 %v135
  %v422 = vunpack.c.h.bf16 %v135
  %v423 = vunpack.c.l.bf16 %v136
  %v424 = vunpack.c.h.bf16 %v136
  %v425 = vunpack.c.l.bf16 %v137
  %v426 = vunpack.c.h.bf16 %v137
  %v427 = vunpack.c.l.bf16 %v138
  %v428 = vunpack.c.h.bf16 %v138
  %v429 = vunpack.c.l.bf16 %v139
  %v430 = vunpack.c.l.bf16 %v140
  %v431 = vunpack.c.h.bf16 %v140
  %v432 = vunpack.c.l.bf16 %v141
  %v433 = vunpack.c.h.bf16 %v141
  %v434 = vunpack.c.l.bf16 %v142
  %v435 = vunpack.c.h.bf16 %v142
  %v436 = vunpack.c.l.bf16 %v143
  %v437 = vunpack.c.h.bf16 %v143
  %v438 = vunpack.c.l.bf16 %v144
  %v439 = vunpack.c.l.bf16 %v145
  %v440 = vunpack.c.h.bf16 %v145
  %v441 = vunpack.c.l.bf16 %v146
  %v442 = vunpack.c.h.bf16 %v146
  %v443 = vunpack.c.l.bf16 %v147
  %v444 = vunpack.c.h.bf16 %v147
  %v445 = vunpack.c.l.bf16 %v148
  %v446 = vunpack.c.h.bf16 %v148
  %v447 = vunpack.c.l.bf16 %v149
  %v448 = vunpack.c.l.bf16 %v150
  %v449 = vunpack.c.h.bf16 %v150
  %v450 = vunpack.c.l.bf16 %v151
  %v451 = vunpack.c.h.bf16 %v151
  %v452 = vunpack.c.l.bf16 %v152
  %v453 = vunpack.c.h.bf16 %v152
  %v454 = vunpack.c.l.bf16 %v153
  %v455 = vunpack.c.h.bf16 %v153
  %v456 = vunpack.c.l.bf16 %v154
  %v457 = vunpack.c.l.bf16 %v155
  %v458 = vunpack.c.h.bf16 %v155
  %v459 = vunpack.c.l.bf16 %v156
  %v460 = vunpack.c.h.bf16 %v156
  %v461 = vunpack.c.l.bf16 %v157
  %v462 = vunpack.c.h.bf16 %v157
  %v463 = vunpack.c.l.bf16 %v158
  %v464 = vunpack.c.h.bf16 %v158
  %v465 = vunpack.c.l.bf16 %v159
  %v466 = vunpack.c.l.bf16 %v160
  %v467 = vunpack.c.h.bf16 %v160
  %v468 = vunpack.c.l.bf16 %v161
  %v469 = vunpack.c.h.bf16 %v161
  %v470 = vunpack.c.l.bf16 %v162
  %v471 = vunpack.c.h.bf16 %v162
  %v472 = vunpack.c.l.bf16 %v163
  %v473 = vunpack.c.h.bf16 %v163
  %v474 = vunpack.c.l.bf16 %v164
  %v475 = vunpack.c.l.bf16 %v165
  %v476 = vunpack.c.h.bf16 %v165
  %v477 = vunpack.c.l.bf16 %v166
  %v478 = vunpack.c.h.bf16 %v166
  %v479 = vunpack.c.l.bf16 %v167
  %v480 = vunpack.c.h.bf16 %v167
  %v481 = vunpack.c.l.bf16 %v168
  %v482 = vunpack.c.h.bf16 %v168
  %v483 = vunpack.c.l.bf16 %v169
  %v484 = vunpack.c.l.bf16 %v170
  %v485 = vunpack.c.h.bf16 %v170
  %v486 = vunpack.c.l.bf16 %v171
  %v487 = vunpack.c.h.bf16 %v171
  %v488 = vunpack.c.l.bf16 %v172
  %v489 = vunpack.c.h.bf16 %v172
  %v490 = vunpack.c.l.bf16 %v173
  %v491 = vunpack.c.h.bf16 %v173
  %v492 = vunpack.c.l.bf16 %v174
  %v493 = vunpack.c.l.bf16 %v175
  %v494 = vunpack.c.h.bf16 %v175
  %v495 = vunpack.c.l.bf16 %v176
  %v496 = vunpack.c.h.bf16 %v176
  %v497 = vunpack.c.l.bf16 %v177
  %v498 = vunpack.c.h.bf16 %v177
  %v499 = vunpack.c.l.bf16 %v178
  %v500 = vunpack.c.h.bf16 %v178
  %v501 = vunpack.c.l.bf16 %v179
  %v502 = vunpack.c.l.bf16 %v180
  %v503 = vunpack.c.h.bf16 %v180
  %v504 = vunpack.c.l.bf16 %v181
  %v505 = vunpack.c.h.bf16 %v181
  %v506 = vunpack.c.l.bf16 %v182
  %v507 = vunpack.c.h.bf16 %v182
  %v508 = vunpack.c.l.bf16 %v183
  %v509 = vunpack.c.h.bf16 %v183
  %v510 = vunpack.c.l.bf16 %v184
  %v511 = vunpack.c.l.bf16 %v185
  %v512 = vunpack.c.h.bf16 %v185
  %v513 = vunpack.c.l.bf16 %v186
  %v514 = vunpack.c.h.bf16 %v186
  %v515 = vunpack.c.l.bf16 %v187
  %v516 = vunpack.c.h.bf16 %v187
  %v517 = vunpack.c.l.bf16 %v188
  %v518 = vunpack.c.h.bf16 %v188
  %v519 = vunpack.c.l.bf16 %v189
  %v520 = vunpack.c.l.bf16 %v190
  %v521 = vunpack.c.h.bf16 %v190
  %v522 = vunpack.c.l.bf16 %v191
  %v523 = vunpack.c.h.bf16 %v191
  %v524 = vunpack.c.l.bf16 %v192
  %v525 = vunpack.c.h.bf16 %v192
  %v526 = vunpack.c.l.bf16 %v193
  %v527 = vunpack.c.h.bf16 %v193
  %v528 = vunpack.c.l.bf16 %v194
  %v529 = vunpack.c.l.bf16 %v195
  %v530 = vunpack.c.h.bf16 %v195
  %v531 = vunpack.c.l.bf16 %v196
  %v532 = vunpack.c.h.bf16 %v196
  %v533 = vunpack.c.l.bf16 %v197
  %v534 = vunpack.c.h.bf16 %v197
  %v535 = vunpack.c.l.bf16 %v198
  %v536 = vunpack.c.h.bf16 %v198
  %v537 = vunpack.c.l.bf16 %v199
  %v538 = vunpack.c.l.bf16 %v200
  %v539 = vunpack.c.h.bf16 %v200
  %v540 = vunpack.c.l.bf16 %v201
  %v541 = vunpack.c.h.bf16 %v201
  %v542 = vunpack.c.l.bf16 %v202
  %v543 = vunpack.c.h.bf16 %v202
  %v544 = vunpack.c.l.bf16 %v203
  %v545 = vunpack.c.h.bf16 %v203
  %v546 = vunpack.c.l.bf16 %v204
  %v547 = vld [vmem:[%s1] sm:$0xff]
  %v548 = vld [vmem:[%s1 + $0x8] sm:$0x1]
  %v551 = vperm.slane %v547, 0
  %v552 = vperm.slane %v547, 1
  %v553 = vperm.slane %v547, 2
  %v554 = vperm.slane %v547, 3
  %v555 = vperm.slane %v547, 4
  %v556 = vperm.slane %v547, 5
  %v557 = vperm.slane %v547, 6
  %v558 = vperm.slane %v547, 7
  %v559 = vperm.slane %v548, 0
  %v569 = vmul.f32 %v205, %v551
  %v570 = vmul.f32 %v206, %v552
  %v571 = vmul.f32 %v207, %v553
  %v572 = vmul.f32 %v208, %v554
  %v573 = vmul.f32 %v209, %v555
  %v574 = vmul.f32 %v210, %v556
  %v575 = vmul.f32 %v211, %v557
  %v576 = vmul.f32 %v212, %v558
  %v577 = vmul.f32 %v213, %v559
  %v578 = vmul.f32 %v214, %v551
  %v579 = vmul.f32 %v215, %v552
  %v580 = vmul.f32 %v216, %v553
  %v581 = vmul.f32 %v217, %v554
  %v582 = vmul.f32 %v218, %v555
  %v583 = vmul.f32 %v219, %v556
  %v584 = vmul.f32 %v220, %v557
  %v585 = vmul.f32 %v221, %v558
  %v586 = vmul.f32 %v222, %v559
  %v587 = vmul.f32 %v223, %v551
  %v588 = vmul.f32 %v224, %v552
  %v589 = vmul.f32 %v225, %v553
  %v590 = vmul.f32 %v226, %v554
  %v591 = vmul.f32 %v227, %v555
  %v592 = vmul.f32 %v228, %v556
  %v593 = vmul.f32 %v229, %v557
  %v594 = vmul.f32 %v230, %v558
  %v595 = vmul.f32 %v231, %v559
  %v596 = vmul.f32 %v232, %v551
  %v597 = vmul.f32 %v233, %v552
  %v598 = vmul.f32 %v234, %v553
  %v599 = vmul.f32 %v235, %v554
  %v600 = vmul.f32 %v236, %v555
  %v601 = vmul.f32 %v237, %v556
  %v602 = vmul.f32 %v238, %v557
  %v603 = vmul.f32 %v239, %v558
  %v604 = vmul.f32 %v240, %v559
  %v605 = vmul.f32 %v241, %v551
  %v606 = vmul.f32 %v242, %v552
  %v607 = vmul.f32 %v243, %v553
  %v608 = vmul.f32 %v244, %v554
  %v609 = vmul.f32 %v245, %v555
  %v610 = vmul.f32 %v246, %v556
  %v611 = vmul.f32 %v247, %v557
  %v612 = vmul.f32 %v248, %v558
  %v613 = vmul.f32 %v249, %v559
  %v614 = vmul.f32 %v250, %v551
  %v615 = vmul.f32 %v251, %v552
  %v616 = vmul.f32 %v252, %v553
  %v617 = vmul.f32 %v253, %v554
  %v618 = vmul.f32 %v254, %v555
  %v619 = vmul.f32 %v255, %v556
  %v620 = vmul.f32 %v256, %v557
  %v621 = vmul.f32 %v257, %v558
  %v622 = vmul.f32 %v258, %v559
  %v623 = vmul.f32 %v259, %v551
  %v624 = vmul.f32 %v260, %v552
  %v625 = vmul.f32 %v261, %v553
  %v626 = vmul.f32 %v262, %v554
  %v627 = vmul.f32 %v263, %v555
  %v628 = vmul.f32 %v264, %v556
  %v629 = vmul.f32 %v265, %v557
  %v630 = vmul.f32 %v266, %v558
  %v631 = vmul.f32 %v267, %v559
  %v632 = vmul.f32 %v268, %v551
  %v633 = vmul.f32 %v269, %v552
  %v634 = vmul.f32 %v270, %v553
  %v635 = vmul.f32 %v271, %v554
  %v636 = vmul.f32 %v272, %v555
  %v637 = vmul.f32 %v273, %v556
  %v638 = vmul.f32 %v274, %v557
  %v639 = vmul.f32 %v275, %v558
  %v640 = vmul.f32 %v276, %v559
  %v641 = vmul.f32 %v277, %v551
  %v642 = vmul.f32 %v278, %v552
  %v643 = vmul.f32 %v279, %v553
  %v644 = vmul.f32 %v280, %v554
  %v645 = vmul.f32 %v281, %v555
  %v646 = vmul.f32 %v282, %v556
  %v647 = vmul.f32 %v283, %v557
  %v648 = vmul.f32 %v284, %v558
  %v649 = vmul.f32 %v285, %v559
  %v650 = vmul.f32 %v286, %v551
  %v651 = vmul.f32 %v287, %v552
  %v652 = vmul.f32 %v288, %v553
  %v653 = vmul.f32 %v289, %v554
  %v654 = vmul.f32 %v290, %v555
  %v655 = vmul.f32 %v291, %v556
  %v656 = vmul.f32 %v292, %v557
  %v657 = vmul.f32 %v293, %v558
  %v658 = vmul.f32 %v294, %v559
  %v659 = vmul.f32 %v295, %v551
  %v660 = vmul.f32 %v296, %v552
  %v661 = vmul.f32 %v297, %v553
  %v662 = vmul.f32 %v298, %v554
  %v663 = vmul.f32 %v299, %v555
  %v664 = vmul.f32 %v300, %v556
  %v665 = vmul.f32 %v301, %v557
  %v666 = vmul.f32 %v302, %v558
  %v667 = vmul.f32 %v303, %v559
  %v668 = vmul.f32 %v304, %v551
  %v669 = vmul.f32 %v305, %v552
  %v670 = vmul.f32 %v306, %v553
  %v671 = vmul.f32 %v307, %v554
  %v672 = vmul.f32 %v308, %v555
  %v673 = vmul.f32 %v309, %v556
  %v674 = vmul.f32 %v310, %v557
  %v675 = vmul.f32 %v311, %v558
  %v676 = vmul.f32 %v312, %v559
  %v677 = vmul.f32 %v313, %v551
  %v678 = vmul.f32 %v314, %v552
  %v679 = vmul.f32 %v315, %v553
  %v680 = vmul.f32 %v316, %v554
  %v681 = vmul.f32 %v317, %v555
  %v682 = vmul.f32 %v318, %v556
  %v683 = vmul.f32 %v319, %v557
  %v684 = vmul.f32 %v320, %v558
  %v685 = vmul.f32 %v321, %v559
  %v686 = vmul.f32 %v322, %v551
  %v687 = vmul.f32 %v323, %v552
  %v688 = vmul.f32 %v324, %v553
  %v689 = vmul.f32 %v325, %v554
  %v690 = vmul.f32 %v326, %v555
  %v691 = vmul.f32 %v327, %v556
  %v692 = vmul.f32 %v328, %v557
  %v693 = vmul.f32 %v329, %v558
  %v694 = vmul.f32 %v330, %v559
  %v695 = vmul.f32 %v331, %v551
  %v696 = vmul.f32 %v332, %v552
  %v697 = vmul.f32 %v333, %v553
  %v698 = vmul.f32 %v334, %v554
  %v699 = vmul.f32 %v335, %v555
  %v700 = vmul.f32 %v336, %v556
  %v701 = vmul.f32 %v337, %v557
  %v702 = vmul.f32 %v338, %v558
  %v703 = vmul.f32 %v339, %v559
  %v704 = vmul.f32 %v340, %v551
  %v705 = vmul.f32 %v341, %v552
  %v706 = vmul.f32 %v342, %v553
  %v707 = vmul.f32 %v343, %v554
  %v708 = vmul.f32 %v344, %v555
  %v709 = vmul.f32 %v345, %v556
  %v710 = vmul.f32 %v346, %v557
  %v711 = vmul.f32 %v347, %v558
  %v712 = vmul.f32 %v348, %v559
  %v713 = vmul.f32 %v349, %v551
  %v714 = vmul.f32 %v350, %v552
  %v715 = vmul.f32 %v351, %v553
  %v716 = vmul.f32 %v352, %v554
  %v717 = vmul.f32 %v353, %v555
  %v718 = vmul.f32 %v354, %v556
  %v719 = vmul.f32 %v355, %v557
  %v720 = vmul.f32 %v356, %v558
  %v721 = vmul.f32 %v357, %v559
  %v722 = vmul.f32 %v358, %v551
  %v723 = vmul.f32 %v359, %v552
  %v724 = vmul.f32 %v360, %v553
  %v725 = vmul.f32 %v361, %v554
  %v726 = vmul.f32 %v362, %v555
  %v727 = vmul.f32 %v363, %v556
  %v728 = vmul.f32 %v364, %v557
  %v729 = vmul.f32 %v365, %v558
  %v730 = vmul.f32 %v366, %v559
  %v731 = vmul.f32 %v367, %v551
  %v732 = vmul.f32 %v368, %v552
  %v733 = vmul.f32 %v369, %v553
  %v734 = vmul.f32 %v370, %v554
  %v735 = vmul.f32 %v371, %v555
  %v736 = vmul.f32 %v372, %v556
  %v737 = vmul.f32 %v373, %v557
  %v738 = vmul.f32 %v374, %v558
  %v739 = vmul.f32 %v375, %v559
  %v740 = vmul.f32 %v376, %v551
  %v741 = vmul.f32 %v377, %v552
  %v742 = vmul.f32 %v378, %v553
  %v743 = vmul.f32 %v379, %v554
  %v744 = vmul.f32 %v380, %v555
  %v745 = vmul.f32 %v381, %v556
  %v746 = vmul.f32 %v382, %v557
  %v747 = vmul.f32 %v383, %v558
  %v748 = vmul.f32 %v384, %v559
  %v749 = vmul.f32 %v385, %v551
  %v750 = vmul.f32 %v386, %v552
  %v751 = vmul.f32 %v387, %v553
  %v752 = vmul.f32 %v388, %v554
  %v753 = vmul.f32 %v389, %v555
  %v754 = vmul.f32 %v390, %v556
  %v755 = vmul.f32 %v391, %v557
  %v756 = vmul.f32 %v392, %v558
  %v757 = vmul.f32 %v393, %v559
  %v758 = vmul.f32 %v394, %v551
  %v759 = vmul.f32 %v395, %v552
  %v760 = vmul.f32 %v396, %v553
  %v761 = vmul.f32 %v397, %v554
  %v762 = vmul.f32 %v398, %v555
  %v763 = vmul.f32 %v399, %v556
  %v764 = vmul.f32 %v400, %v557
  %v765 = vmul.f32 %v401, %v558
  %v766 = vmul.f32 %v402, %v559
  %v767 = vmul.f32 %v403, %v551
  %v768 = vmul.f32 %v404, %v552
  %v769 = vmul.f32 %v405, %v553
  %v770 = vmul.f32 %v406, %v554
  %v771 = vmul.f32 %v407, %v555
  %v772 = vmul.f32 %v408, %v556
  %v773 = vmul.f32 %v409, %v557
  %v774 = vmul.f32 %v410, %v558
  %v775 = vmul.f32 %v411, %v559
  %v776 = vmul.f32 %v412, %v551
  %v777 = vmul.f32 %v413, %v552
  %v778 = vmul.f32 %v414, %v553
  %v779 = vmul.f32 %v415, %v554
  %v780 = vmul.f32 %v416, %v555
  %v781 = vmul.f32 %v417, %v556
  %v782 = vmul.f32 %v418, %v557
  %v783 = vmul.f32 %v419, %v558
  %v784 = vmul.f32 %v420, %v559
  %v785 = vmul.f32 %v421, %v551
  %v786 = vmul.f32 %v422, %v552
  %v787 = vmul.f32 %v423, %v553
  %v788 = vmul.f32 %v424, %v554
  %v789 = vmul.f32 %v425, %v555
  %v790 = vmul.f32 %v426, %v556
  %v791 = vmul.f32 %v427, %v557
  %v792 = vmul.f32 %v428, %v558
  %v793 = vmul.f32 %v429, %v559
  %v794 = vmul.f32 %v430, %v551
  %v795 = vmul.f32 %v431, %v552
  %v796 = vmul.f32 %v432, %v553
  %v797 = vmul.f32 %v433, %v554
  %v798 = vmul.f32 %v434, %v555
  %v799 = vmul.f32 %v435, %v556
  %v800 = vmul.f32 %v436, %v557
  %v801 = vmul.f32 %v437, %v558
  %v802 = vmul.f32 %v438, %v559
  %v803 = vmul.f32 %v439, %v551
  %v804 = vmul.f32 %v440, %v552
  %v805 = vmul.f32 %v441, %v553
  %v806 = vmul.f32 %v442, %v554
  %v807 = vmul.f32 %v443, %v555
  %v808 = vmul.f32 %v444, %v556
  %v809 = vmul.f32 %v445, %v557
  %v810 = vmul.f32 %v446, %v558
  %v811 = vmul.f32 %v447, %v559
  %v812 = vmul.f32 %v448, %v551
  %v813 = vmul.f32 %v449, %v552
  %v814 = vmul.f32 %v450, %v553
  %v815 = vmul.f32 %v451, %v554
  %v816 = vmul.f32 %v452, %v555
  %v817 = vmul.f32 %v453, %v556
  %v818 = vmul.f32 %v454, %v557
  %v819 = vmul.f32 %v455, %v558
  %v820 = vmul.f32 %v456, %v559
  %v821 = vmul.f32 %v457, %v551
  %v822 = vmul.f32 %v458, %v552
  %v823 = vmul.f32 %v459, %v553
  %v824 = vmul.f32 %v460, %v554
  %v825 = vmul.f32 %v461, %v555
  %v826 = vmul.f32 %v462, %v556
  %v827 = vmul.f32 %v463, %v557
  %v828 = vmul.f32 %v464, %v558
  %v829 = vmul.f32 %v465, %v559
  %v830 = vmul.f32 %v466, %v551
  %v831 = vmul.f32 %v467, %v552
  %v832 = vmul.f32 %v468, %v553
  %v833 = vmul.f32 %v469, %v554
  %v834 = vmul.f32 %v470, %v555
  %v835 = vmul.f32 %v471, %v556
  %v836 = vmul.f32 %v472, %v557
  %v837 = vmul.f32 %v473, %v558
  %v838 = vmul.f32 %v474, %v559
  %v839 = vmul.f32 %v475, %v551
  %v840 = vmul.f32 %v476, %v552
  %v841 = vmul.f32 %v477, %v553
  %v842 = vmul.f32 %v478, %v554
  %v843 = vmul.f32 %v479, %v555
  %v844 = vmul.f32 %v480, %v556
  %v845 = vmul.f32 %v481, %v557
  %v846 = vmul.f32 %v482, %v558
  %v847 = vmul.f32 %v483, %v559
  %v848 = vmul.f32 %v484, %v551
  %v849 = vmul.f32 %v485, %v552
  %v850 = vmul.f32 %v486, %v553
  %v851 = vmul.f32 %v487, %v554
  %v852 = vmul.f32 %v488, %v555
  %v853 = vmul.f32 %v489, %v556
  %v854 = vmul.f32 %v490, %v557
  %v855 = vmul.f32 %v491, %v558
  %v856 = vmul.f32 %v492, %v559
  %v857 = vmul.f32 %v493, %v551
  %v858 = vmul.f32 %v494, %v552
  %v859 = vmul.f32 %v495, %v553
  %v860 = vmul.f32 %v496, %v554
  %v861 = vmul.f32 %v497, %v555
  %v862 = vmul.f32 %v498, %v556
  %v863 = vmul.f32 %v499, %v557
  %v864 = vmul.f32 %v500, %v558
  %v865 = vmul.f32 %v501, %v559
  %v866 = vmul.f32 %v502, %v551
  %v867 = vmul.f32 %v503, %v552
  %v868 = vmul.f32 %v504, %v553
  %v869 = vmul.f32 %v505, %v554
  %v870 = vmul.f32 %v506, %v555
  %v871 = vmul.f32 %v507, %v556
  %v872 = vmul.f32 %v508, %v557
  %v873 = vmul.f32 %v509, %v558
  %v874 = vmul.f32 %v510, %v559
  %v875 = vmul.f32 %v511, %v551
  %v876 = vmul.f32 %v512, %v552
  %v877 = vmul.f32 %v513, %v553
  %v878 = vmul.f32 %v514, %v554
  %v879 = vmul.f32 %v515, %v555
  %v880 = vmul.f32 %v516, %v556
  %v881 = vmul.f32 %v517, %v557
  %v882 = vmul.f32 %v518, %v558
  %v883 = vmul.f32 %v519, %v559
  %v884 = vmul.f32 %v520, %v551
  %v885 = vmul.f32 %v521, %v552
  %v886 = vmul.f32 %v522, %v553
  %v887 = vmul.f32 %v523, %v554
  %v888 = vmul.f32 %v524, %v555
  %v889 = vmul.f32 %v525, %v556
  %v890 = vmul.f32 %v526, %v557
  %v891 = vmul.f32 %v527, %v558
  %v892 = vmul.f32 %v528, %v559
  %v893 = vmul.f32 %v529, %v551
  %v894 = vmul.f32 %v530, %v552
  %v895 = vmul.f32 %v531, %v553
  %v896 = vmul.f32 %v532, %v554
  %v897 = vmul.f32 %v533, %v555
  %v898 = vmul.f32 %v534, %v556
  %v899 = vmul.f32 %v535, %v557
  %v900 = vmul.f32 %v536, %v558
  %v901 = vmul.f32 %v537, %v559
  %v902 = vmul.f32 %v538, %v551
  %v903 = vmul.f32 %v539, %v552
  %v904 = vmul.f32 %v540, %v553
  %v905 = vmul.f32 %v541, %v554
  %v906 = vmul.f32 %v542, %v555
  %v907 = vmul.f32 %v543, %v556
  %v908 = vmul.f32 %v544, %v557
  %v909 = vmul.f32 %v545, %v558
  %v910 = vmul.f32 %v546, %v559
  %v911 = vpack.c.bf16 %v578, %v569
  %v912 = vpack.c.bf16 %v579, %v570
  %v913 = vpack.c.bf16 %v580, %v571
  %v914 = vpack.c.bf16 %v581, %v572
  %v915 = vpack.c.bf16 %v582, %v573
  %v916 = vpack.c.bf16 %v583, %v574
  %v917 = vpack.c.bf16 %v584, %v575
  %v918 = vpack.c.bf16 %v585, %v576
  %v919 = vpack.c.bf16 %v586, %v577
  %v920 = vpack.c.bf16 %v596, %v587
  %v921 = vpack.c.bf16 %v597, %v588
  %v922 = vpack.c.bf16 %v598, %v589
  %v923 = vpack.c.bf16 %v599, %v590
  %v924 = vpack.c.bf16 %v600, %v591
  %v925 = vpack.c.bf16 %v601, %v592
  %v926 = vpack.c.bf16 %v602, %v593
  %v927 = vpack.c.bf16 %v603, %v594
  %v928 = vpack.c.bf16 %v604, %v595
  %v929 = vpack.c.bf16 %v614, %v605
  %v930 = vpack.c.bf16 %v615, %v606
  %v931 = vpack.c.bf16 %v616, %v607
  %v932 = vpack.c.bf16 %v617, %v608
  %v933 = vpack.c.bf16 %v618, %v609
  %v934 = vpack.c.bf16 %v619, %v610
  %v935 = vpack.c.bf16 %v620, %v611
  %v936 = vpack.c.bf16 %v621, %v612
  %v937 = vpack.c.bf16 %v622, %v613
  %v938 = vpack.c.bf16 %v632, %v623
  %v939 = vpack.c.bf16 %v633, %v624
  %v940 = vpack.c.bf16 %v634, %v625
  %v941 = vpack.c.bf16 %v635, %v626
  %v942 = vpack.c.bf16 %v636, %v627
  %v943 = vpack.c.bf16 %v637, %v628
  %v944 = vpack.c.bf16 %v638, %v629
  %v945 = vpack.c.bf16 %v639, %v630
  %v946 = vpack.c.bf16 %v640, %v631
  %v947 = vpack.c.bf16 %v650, %v641
  %v948 = vpack.c.bf16 %v651, %v642
  %v949 = vpack.c.bf16 %v652, %v643
  %v950 = vpack.c.bf16 %v653, %v644
  %v951 = vpack.c.bf16 %v654, %v645
  %v952 = vpack.c.bf16 %v655, %v646
  %v953 = vpack.c.bf16 %v656, %v647
  %v954 = vpack.c.bf16 %v657, %v648
  %v955 = vpack.c.bf16 %v658, %v649
  %v956 = vpack.c.bf16 %v668, %v659
  %v957 = vpack.c.bf16 %v669, %v660
  %v958 = vpack.c.bf16 %v670, %v661
  %v959 = vpack.c.bf16 %v671, %v662
  %v960 = vpack.c.bf16 %v672, %v663
  %v961 = vpack.c.bf16 %v673, %v664
  %v962 = vpack.c.bf16 %v674, %v665
  %v963 = vpack.c.bf16 %v675, %v666
  %v964 = vpack.c.bf16 %v676, %v667
  %v965 = vpack.c.bf16 %v686, %v677
  %v966 = vpack.c.bf16 %v687, %v678
  %v967 = vpack.c.bf16 %v688, %v679
  %v968 = vpack.c.bf16 %v689, %v680
  %v969 = vpack.c.bf16 %v690, %v681
  %v970 = vpack.c.bf16 %v691, %v682
  %v971 = vpack.c.bf16 %v692, %v683
  %v972 = vpack.c.bf16 %v693, %v684
  %v973 = vpack.c.bf16 %v694, %v685
  %v974 = vpack.c.bf16 %v704, %v695
  %v975 = vpack.c.bf16 %v705, %v696
  %v976 = vpack.c.bf16 %v706, %v697
  %v977 = vpack.c.bf16 %v707, %v698
  %v978 = vpack.c.bf16 %v708, %v699
  %v979 = vpack.c.bf16 %v709, %v700
  %v980 = vpack.c.bf16 %v710, %v701
  %v981 = vpack.c.bf16 %v711, %v702
  %v982 = vpack.c.bf16 %v712, %v703
  %v983 = vpack.c.bf16 %v722, %v713
  %v984 = vpack.c.bf16 %v723, %v714
  %v985 = vpack.c.bf16 %v724, %v715
  %v986 = vpack.c.bf16 %v725, %v716
  %v987 = vpack.c.bf16 %v726, %v717
  %v988 = vpack.c.bf16 %v727, %v718
  %v989 = vpack.c.bf16 %v728, %v719
  %v990 = vpack.c.bf16 %v729, %v720
  %v991 = vpack.c.bf16 %v730, %v721
  %v992 = vpack.c.bf16 %v740, %v731
  %v993 = vpack.c.bf16 %v741, %v732
  %v994 = vpack.c.bf16 %v742, %v733
  %v995 = vpack.c.bf16 %v743, %v734
  %v996 = vpack.c.bf16 %v744, %v735
  %v997 = vpack.c.bf16 %v745, %v736
  %v998 = vpack.c.bf16 %v746, %v737
  %v999 = vpack.c.bf16 %v747, %v738
  %v1000 = vpack.c.bf16 %v748, %v739
  %v1001 = vpack.c.bf16 %v758, %v749
  %v1002 = vpack.c.bf16 %v759, %v750
  %v1003 = vpack.c.bf16 %v760, %v751
  %v1004 = vpack.c.bf16 %v761, %v752
  %v1005 = vpack.c.bf16 %v762, %v753
  %v1006 = vpack.c.bf16 %v763, %v754
  %v1007 = vpack.c.bf16 %v764, %v755
  %v1008 = vpack.c.bf16 %v765, %v756
  %v1009 = vpack.c.bf16 %v766, %v757
  %v1010 = vpack.c.bf16 %v776, %v767
  %v1011 = vpack.c.bf16 %v777, %v768
  %v1012 = vpack.c.bf16 %v778, %v769
  %v1013 = vpack.c.bf16 %v779, %v770
  %v1014 = vpack.c.bf16 %v780, %v771
  %v1015 = vpack.c.bf16 %v781, %v772
  %v1016 = vpack.c.bf16 %v782, %v773
  %v1017 = vpack.c.bf16 %v783, %v774
  %v1018 = vpack.c.bf16 %v784, %v775
  %v1019 = vpack.c.bf16 %v794, %v785
  %v1020 = vpack.c.bf16 %v795, %v786
  %v1021 = vpack.c.bf16 %v796, %v787
  %v1022 = vpack.c.bf16 %v797, %v788
  %v1023 = vpack.c.bf16 %v798, %v789
  %v1024 = vpack.c.bf16 %v799, %v790
  %v1025 = vpack.c.bf16 %v800, %v791
  %v1026 = vpack.c.bf16 %v801, %v792
  %v1027 = vpack.c.bf16 %v802, %v793
  %v1028 = vpack.c.bf16 %v812, %v803
  %v1029 = vpack.c.bf16 %v813, %v804
  %v1030 = vpack.c.bf16 %v814, %v805
  %v1031 = vpack.c.bf16 %v815, %v806
  %v1032 = vpack.c.bf16 %v816, %v807
  %v1033 = vpack.c.bf16 %v817, %v808
  %v1034 = vpack.c.bf16 %v818, %v809
  %v1035 = vpack.c.bf16 %v819, %v810
  %v1036 = vpack.c.bf16 %v820, %v811
  %v1037 = vpack.c.bf16 %v830, %v821
  %v1038 = vpack.c.bf16 %v831, %v822
  %v1039 = vpack.c.bf16 %v832, %v823
  %v1040 = vpack.c.bf16 %v833, %v824
  %v1041 = vpack.c.bf16 %v834, %v825
  %v1042 = vpack.c.bf16 %v835, %v826
  %v1043 = vpack.c.bf16 %v836, %v827
  %v1044 = vpack.c.bf16 %v837, %v828
  %v1045 = vpack.c.bf16 %v838, %v829
  %v1046 = vpack.c.bf16 %v848, %v839
  %v1047 = vpack.c.bf16 %v849, %v840
  %v1048 = vpack.c.bf16 %v850, %v841
  %v1049 = vpack.c.bf16 %v851, %v842
  %v1050 = vpack.c.bf16 %v852, %v843
  %v1051 = vpack.c.bf16 %v853, %v844
  %v1052 = vpack.c.bf16 %v854, %v845
  %v1053 = vpack.c.bf16 %v855, %v846
  %v1054 = vpack.c.bf16 %v856, %v847
  %v1055 = vpack.c.bf16 %v866, %v857
  %v1056 = vpack.c.bf16 %v867, %v858
  %v1057 = vpack.c.bf16 %v868, %v859
  %v1058 = vpack.c.bf16 %v869, %v860
  %v1059 = vpack.c.bf16 %v870, %v861
  %v1060 = vpack.c.bf16 %v871, %v862
  %v1061 = vpack.c.bf16 %v872, %v863
  %v1062 = vpack.c.bf16 %v873, %v864
  %v1063 = vpack.c.bf16 %v874, %v865
  %v1064 = vpack.c.bf16 %v884, %v875
  %v1065 = vpack.c.bf16 %v885, %v876
  %v1066 = vpack.c.bf16 %v886, %v877
  %v1067 = vpack.c.bf16 %v887, %v878
  %v1068 = vpack.c.bf16 %v888, %v879
  %v1069 = vpack.c.bf16 %v889, %v880
  %v1070 = vpack.c.bf16 %v890, %v881
  %v1071 = vpack.c.bf16 %v891, %v882
  %v1072 = vpack.c.bf16 %v892, %v883
  %v1073 = vpack.c.bf16 %v902, %v893
  %v1074 = vpack.c.bf16 %v903, %v894
  %v1075 = vpack.c.bf16 %v904, %v895
  %v1076 = vpack.c.bf16 %v905, %v896
  %v1077 = vpack.c.bf16 %v906, %v897
  %v1078 = vpack.c.bf16 %v907, %v898
  %v1079 = vpack.c.bf16 %v908, %v899
  %v1080 = vpack.c.bf16 %v909, %v900
  %v1081 = vpack.c.bf16 %v910, %v901
  %v1082 = vld [vmem:[%s0] sm:$0xff]
  %v1083 = vld [vmem:[%s0 + $0x8] sm:$0xff]
  %v1084 = vld [vmem:[%s0 + $0x10] sm:$0xff]
  %v1085 = vld [vmem:[%s0 + $0x18] sm:$0xff]
  %v1086 = vld [vmem:[%s0 + $0x20] sm:$0xff]
  %v1087 = vld [vmem:[%s0 + $0x28] sm:$0xff]
  %v1088 = vld [vmem:[%s0 + $0x30] sm:$0xff]
  %v1089 = vld [vmem:[%s0 + $0x38] sm:$0xff]
  %v1090 = vld [vmem:[%s0 + $0x40] sm:$0xff]
  %v1091 = vld [vmem:[%s0 + $0x48] sm:$0xff]
  %v1092 = vld [vmem:[%s0 + $0x50] sm:$0xff]
  %v1093 = vld [vmem:[%s0 + $0x58] sm:$0xff]
  %v1094 = vld [vmem:[%s0 + $0x60] sm:$0xff]
  %v1095 = vld [vmem:[%s0 + $0x68] sm:$0xff]
  %v1096 = vld [vmem:[%s0 + $0x70] sm:$0xff]
  %v1097 = vld [vmem:[%s0 + $0x78] sm:$0xff]
  %v1098 = vld [vmem:[%s0 + $0x80] sm:$0xff]
  %v1099 = vld [vmem:[%s0 + $0x88] sm:$0xff]
  %v1100 = vld [vmem:[%s0 + $0x90] sm:$0xff]
  %v1101 = vld [vmem:[%s0 + $0x98] sm:$0xff]
  %v1102 = vld [vmem:[%s0 + $0xa0] sm:$0xff]
  %v1103 = vld [vmem:[%s0 + $0xa8] sm:$0xff]
  %v1104 = vld [vmem:[%s0 + $0xb0] sm:$0xff]
  %v1105 = vld [vmem:[%s0 + $0xb8] sm:$0xff]
  %v1106 = vld [vmem:[%s0 + $0xc0] sm:$0xff]
  %v1107 = vld [vmem:[%s0 + $0xc8] sm:$0xff]
  %v1108 = vld [vmem:[%s0 + $0xd0] sm:$0xff]
  %v1109 = vld [vmem:[%s0 + $0xd8] sm:$0xff]
  %v1110 = vld [vmem:[%s0 + $0xe0] sm:$0xff]
  %v1111 = vld [vmem:[%s0 + $0xe8] sm:$0xff]
  %v1112 = vld [vmem:[%s0 + $0xf0] sm:$0xff]
  %v1113 = vld [vmem:[%s0 + $0xf8] sm:$0xff]
  %v1114 = vld [vmem:[%s0 + $0x100] sm:$0xff]
  %v1115 = vld [vmem:[%s0 + $0x108] sm:$0xff]
  %v1116 = vld [vmem:[%s0 + $0x110] sm:$0xff]
  %v1117 = vld [vmem:[%s0 + $0x118] sm:$0xff]
  %v1118 = vld [vmem:[%s0 + $0x120] sm:$0xff]
  %v1119 = vld [vmem:[%s0 + $0x128] sm:$0xff]
  %v1120 = vld [vmem:[%s0 + $0x130] sm:$0xff]
  %v1121 = vld [vmem:[%s0 + $0x138] sm:$0xff]
  %v1122 = vld [vmem:[%s0 + $0x140] sm:$0xff]
  %v1123 = vld [vmem:[%s0 + $0x148] sm:$0xff]
  %v1124 = vld [vmem:[%s0 + $0x150] sm:$0xff]
  %v1125 = vld [vmem:[%s0 + $0x158] sm:$0xff]
  %v1126 = vld [vmem:[%s0 + $0x160] sm:$0xff]
  %v1127 = vld [vmem:[%s0 + $0x168] sm:$0xff]
  %v1128 = vld [vmem:[%s0 + $0x170] sm:$0xff]
  %v1129 = vld [vmem:[%s0 + $0x178] sm:$0xff]
  %v1130 = vld [vmem:[%s0 + $0x180] sm:$0xff]
  %v1131 = vld [vmem:[%s0 + $0x188] sm:$0xff]
  %v1132 = vld [vmem:[%s0 + $0x190] sm:$0xff]
  %v1133 = vld [vmem:[%s0 + $0x198] sm:$0xff]
  %v1134 = vld [vmem:[%s0 + $0x1a0] sm:$0xff]
  %v1135 = vld [vmem:[%s0 + $0x1a8] sm:$0xff]
  %v1136 = vld [vmem:[%s0 + $0x1b0] sm:$0xff]
  %v1137 = vld [vmem:[%s0 + $0x1b8] sm:$0xff]
  %v1138 = vld [vmem:[%s0 + $0x1c0] sm:$0xff]
  %v1139 = vld [vmem:[%s0 + $0x1c8] sm:$0xff]
  %v1140 = vld [vmem:[%s0 + $0x1d0] sm:$0xff]
  %v1141 = vld [vmem:[%s0 + $0x1d8] sm:$0xff]
  %v1142 = vld [vmem:[%s0 + $0x1e0] sm:$0xff]
  %v1143 = vld [vmem:[%s0 + $0x1e8] sm:$0xff]
  %v1144 = vld [vmem:[%s0 + $0x1f0] sm:$0xff]
  %v1145 = vld [vmem:[%s0 + $0x1f8] sm:$0xff]
  %v1146 = vld [vmem:[%s0 + $0x200] sm:$0xff]
  %v1147 = vld [vmem:[%s0 + $0x208] sm:$0xff]
  %v1148 = vld [vmem:[%s0 + $0x210] sm:$0xff]
  %v1149 = vld [vmem:[%s0 + $0x218] sm:$0xff]
  %v1150 = vld [vmem:[%s0 + $0x220] sm:$0xff]
  %v1151 = vld [vmem:[%s0 + $0x228] sm:$0xff]
  %v1152 = vld [vmem:[%s0 + $0x230] sm:$0xff]
  %v1153 = vld [vmem:[%s0 + $0x238] sm:$0xff]
  %v1154 = vld [vmem:[%s0 + $0x240] sm:$0xff]
  %v1155 = vld [vmem:[%s0 + $0x248] sm:$0xff]
  %v1156 = vld [vmem:[%s0 + $0x250] sm:$0xff]
  %v1157 = vld [vmem:[%s0 + $0x258] sm:$0xff]
  %v1158 = vld [vmem:[%s0 + $0x260] sm:$0xff]
  %v1159 = vld [vmem:[%s0 + $0x268] sm:$0xff]
  %v1160 = vld [vmem:[%s0 + $0x270] sm:$0xff]
  %v1161 = vld [vmem:[%s0 + $0x278] sm:$0xff]
  %v1162 = vld [vmem:[%s0 + $0x280] sm:$0xff]
  %v1163 = vld [vmem:[%s0 + $0x288] sm:$0xff]
  %v1164 = vld [vmem:[%s0 + $0x290] sm:$0xff]
  %v1165 = vld [vmem:[%s0 + $0x298] sm:$0xff]
  %v1166 = vld [vmem:[%s0 + $0x2a0] sm:$0xff]
  %v1167 = vld [vmem:[%s0 + $0x2a8] sm:$0xff]
  %v1168 = vld [vmem:[%s0 + $0x2b0] sm:$0xff]
  %v1169 = vld [vmem:[%s0 + $0x2b8] sm:$0xff]
  %v1170 = vld [vmem:[%s0 + $0x2c0] sm:$0xff]
  %v1171 = vld [vmem:[%s0 + $0x2c8] sm:$0xff]
  %v1172 = vld [vmem:[%s0 + $0x2d0] sm:$0xff]
  %v1173 = vld [vmem:[%s0 + $0x2d8] sm:$0xff]
  %v1174 = vld [vmem:[%s0 + $0x2e0] sm:$0xff]
  %v1175 = vld [vmem:[%s0 + $0x2e8] sm:$0xff]
  %v1176 = vld [vmem:[%s0 + $0x2f0] sm:$0xff]
  %v1177 = vld [vmem:[%s0 + $0x2f8] sm:$0xff]
  %v1178 = vld [vmem:[%s0 + $0x300] sm:$0xff]
  %v1179 = vld [vmem:[%s0 + $0x308] sm:$0xff]
  %v1180 = vld [vmem:[%s0 + $0x310] sm:$0xff]
  %v1181 = vld [vmem:[%s0 + $0x318] sm:$0xff]
  %v1182 = vld [vmem:[%s0 + $0x320] sm:$0xff]
  %v1183 = vld [vmem:[%s0 + $0x328] sm:$0xff]
  %v1184 = vld [vmem:[%s0 + $0x330] sm:$0xff]
  %v1185 = vld [vmem:[%s0 + $0x338] sm:$0xff]
  %v1186 = vld [vmem:[%s0 + $0x340] sm:$0xff]
  %v1187 = vld [vmem:[%s0 + $0x348] sm:$0xff]
  %v1188 = vld [vmem:[%s0 + $0x350] sm:$0xff]
  %v1189 = vld [vmem:[%s0 + $0x358] sm:$0xff]
  %v1190 = vld [vmem:[%s0 + $0x360] sm:$0xff]
  %v1191 = vld [vmem:[%s0 + $0x368] sm:$0xff]
  %v1192 = vld [vmem:[%s0 + $0x370] sm:$0xff]
  %v1193 = vld [vmem:[%s0 + $0x378] sm:$0xff]
  %v1194 = vld [vmem:[%s0 + $0x380] sm:$0xff]
  %v1195 = vld [vmem:[%s0 + $0x388] sm:$0xff]
  %v1196 = vld [vmem:[%s0 + $0x390] sm:$0xff]
  %v1197 = vld [vmem:[%s0 + $0x398] sm:$0xff]
  %v1198 = vld [vmem:[%s0 + $0x3a0] sm:$0xff]
  %v1199 = vld [vmem:[%s0 + $0x3a8] sm:$0xff]
  %v1200 = vld [vmem:[%s0 + $0x3b0] sm:$0xff]
  %v1201 = vld [vmem:[%s0 + $0x3b8] sm:$0xff]
  %v1202 = vld [vmem:[%s0 + $0x3c0] sm:$0xff]
  %v1203 = vld [vmem:[%s0 + $0x3c8] sm:$0xff]
  %v1204 = vld [vmem:[%s0 + $0x3d0] sm:$0xff]
  %v1205 = vld [vmem:[%s0 + $0x3d8] sm:$0xff]
  %v1206 = vld [vmem:[%s0 + $0x3e0] sm:$0xff]
  %v1207 = vld [vmem:[%s0 + $0x3e8] sm:$0xff]
  %v1208 = vld [vmem:[%s0 + $0x3f0] sm:$0xff]
  %v1209 = vld [vmem:[%s0 + $0x3f8] sm:$0xff]
  %v1210 = vld [vmem:[%s0 + $0x400] sm:$0xff]
  %v1211 = vld [vmem:[%s0 + $0x408] sm:$0xff]
  %v1212 = vld [vmem:[%s0 + $0x410] sm:$0xff]
  %v1213 = vld [vmem:[%s0 + $0x418] sm:$0xff]
  %v1214 = vpack.c.bf16 %v1083, %v1082
  %v1215 = vpack.c.bf16 %v1085, %v1084
  %v1216 = vpack.c.bf16 %v1087, %v1086
  %v1217 = vpack.c.bf16 %v1089, %v1088
  %v1218 = vpack.c.bf16 %v1091, %v1090
  %v1219 = vpack.c.bf16 %v1093, %v1092
  %v1220 = vpack.c.bf16 %v1095, %v1094
  %v1221 = vpack.c.bf16 %v1097, %v1096
  %v1222 = vpack.c.bf16 %v1099, %v1098
  %v1223 = vpack.c.bf16 %v1101, %v1100
  %v1224 = vpack.c.bf16 %v1103, %v1102
  %v1225 = vpack.c.bf16 %v1105, %v1104
  %v1226 = vpack.c.bf16 %v1107, %v1106
  %v1227 = vpack.c.bf16 %v1109, %v1108
  %v1228 = vpack.c.bf16 %v1111, %v1110
  %v1229 = vpack.c.bf16 %v1113, %v1112
  %v1230 = vpack.c.bf16 %v1115, %v1114
  %v1231 = vpack.c.bf16 %v1117, %v1116
  %v1232 = vpack.c.bf16 %v1119, %v1118
  %v1233 = vpack.c.bf16 %v1121, %v1120
  %v1234 = vpack.c.bf16 %v1123, %v1122
  %v1235 = vpack.c.bf16 %v1125, %v1124
  %v1236 = vpack.c.bf16 %v1127, %v1126
  %v1237 = vpack.c.bf16 %v1129, %v1128
  %v1238 = vpack.c.bf16 %v1131, %v1130
  %v1239 = vpack.c.bf16 %v1133, %v1132
  %v1240 = vpack.c.bf16 %v1135, %v1134
  %v1241 = vpack.c.bf16 %v1137, %v1136
  %v1242 = vpack.c.bf16 %v1139, %v1138
  %v1243 = vpack.c.bf16 %v1141, %v1140
  %v1244 = vpack.c.bf16 %v1143, %v1142
  %v1245 = vpack.c.bf16 %v1145, %v1144
  %v1246 = vpack.c.bf16 %v1147, %v1146
  %v1247 = vpack.c.bf16 %v1149, %v1148
  %v1248 = vpack.c.bf16 %v1151, %v1150
  %v1249 = vpack.c.bf16 %v1153, %v1152
  %v1250 = vpack.c.bf16 %v1155, %v1154
  %v1251 = vpack.c.bf16 %v1157, %v1156
  %v1252 = vpack.c.bf16 %v1159, %v1158
  %v1253 = vpack.c.bf16 %v1161, %v1160
  %v1254 = vpack.c.bf16 %v1163, %v1162
  %v1255 = vpack.c.bf16 %v1165, %v1164
  %v1256 = vpack.c.bf16 %v1167, %v1166
  %v1257 = vpack.c.bf16 %v1169, %v1168
  %v1258 = vpack.c.bf16 %v1171, %v1170
  %v1259 = vpack.c.bf16 %v1173, %v1172
  %v1260 = vpack.c.bf16 %v1175, %v1174
  %v1261 = vpack.c.bf16 %v1177, %v1176
  %v1262 = vpack.c.bf16 %v1179, %v1178
  %v1263 = vpack.c.bf16 %v1181, %v1180
  %v1264 = vpack.c.bf16 %v1183, %v1182
  %v1265 = vpack.c.bf16 %v1185, %v1184
  %v1266 = vpack.c.bf16 %v1187, %v1186
  %v1267 = vpack.c.bf16 %v1189, %v1188
  %v1268 = vpack.c.bf16 %v1191, %v1190
  %v1269 = vpack.c.bf16 %v1193, %v1192
  %v1270 = vpack.c.bf16 %v1195, %v1194
  %v1271 = vpack.c.bf16 %v1197, %v1196
  %v1272 = vpack.c.bf16 %v1199, %v1198
  %v1273 = vpack.c.bf16 %v1201, %v1200
  %v1274 = vpack.c.bf16 %v1203, %v1202
  %v1275 = vpack.c.bf16 %v1205, %v1204
  %v1276 = vpack.c.bf16 %v1207, %v1206
  %v1277 = vpack.c.bf16 %v1209, %v1208
  %v1278 = vpack.c.bf16 %v1211, %v1210
  %v1279 = vpack.c.bf16 %v1213, %v1212
  %vm1280 = vcmask 261120
  %v1282 = vsel %vm1280, %v919, 0
  %v1285 = vsel %vm1280, %v928, 0
  %v1288 = vsel %vm1280, %v937, 0
  %v1291 = vsel %vm1280, %v946, 0
  %v1294 = vsel %vm1280, %v955, 0
  %v1297 = vsel %vm1280, %v964, 0
  %v1300 = vsel %vm1280, %v973, 0
  %v1303 = vsel %vm1280, %v982, 0
  %v1306 = vsel %vm1280, %v991, 0
  %v1309 = vsel %vm1280, %v1000, 0
  %v1312 = vsel %vm1280, %v1009, 0
  %v1315 = vsel %vm1280, %v1018, 0
  %v1318 = vsel %vm1280, %v1027, 0
  %v1321 = vsel %vm1280, %v1036, 0
  %v1324 = vsel %vm1280, %v1045, 0
  %v1327 = vsel %vm1280, %v1054, 0
  %v1330 = vsel %vm1280, %v1063, 0
  %v1333 = vsel %vm1280, %v1072, 0
  %v1336 = vsel %vm1280, %v1081, 0
  %1338 = vmatpush.bf16.msra.mxu0 %v1221
  %1339 = vmatpush.bf16.msra.mxu0 %v1220
  %1340 = vmatpush.bf16.msra.mxu0 %v1219
  %1341 = vmatpush.bf16.msra.mxu0 %v1218
  %1342 = vmatpush.bf16.msra.mxu0 %v1217
  %1343 = vmatpush.bf16.msra.mxu0 %v1216
  %1344 = vmatpush.bf16.msra.mxu0 %v1215
  %1345 = vmatpush.bf16.msra.mxu0 %v1214
  %1346 = vmatmul.bf16.gmra.mxu0 %v911
  %v1347 = vpop.f32.mrf.mxu0
  %v1348 = vadd.f32 0.0, %v1347
  %v1349 = vpop.f32.mrf.mxu0
  %v1350 = vadd.f32 0.0, %v1349
  %1351 = vmatmul.bf16.gmra.mxu0 %v920
  %v1352 = vpop.f32.mrf.mxu0
  %v1353 = vadd.f32 0.0, %v1352
  %v1354 = vpop.f32.mrf.mxu0
  %v1355 = vadd.f32 0.0, %v1354
  %1356 = vmatmul.bf16.gmra.mxu0 %v929
  %v1357 = vpop.f32.mrf.mxu0
  %v1358 = vadd.f32 0.0, %v1357
  %v1359 = vpop.f32.mrf.mxu0
  %v1360 = vadd.f32 0.0, %v1359
  %1361 = vmatmul.bf16.gmra.mxu0 %v938
  %v1362 = vpop.f32.mrf.mxu0
  %v1363 = vadd.f32 0.0, %v1362
  %v1364 = vpop.f32.mrf.mxu0
  %v1365 = vadd.f32 0.0, %v1364
  %1366 = vmatmul.bf16.gmra.mxu0 %v947
  %v1367 = vpop.f32.mrf.mxu0
  %v1368 = vadd.f32 0.0, %v1367
  %v1369 = vpop.f32.mrf.mxu0
  %v1370 = vadd.f32 0.0, %v1369
  %1371 = vmatmul.bf16.gmra.mxu0 %v956
  %v1372 = vpop.f32.mrf.mxu0
  %v1373 = vadd.f32 0.0, %v1372
  %v1374 = vpop.f32.mrf.mxu0
  %v1375 = vadd.f32 0.0, %v1374
  %1376 = vmatmul.bf16.gmra.mxu0 %v965
  %v1377 = vpop.f32.mrf.mxu0
  %v1378 = vadd.f32 0.0, %v1377
  %v1379 = vpop.f32.mrf.mxu0
  %v1380 = vadd.f32 0.0, %v1379
  %1381 = vmatmul.bf16.gmra.mxu0 %v974
  %v1382 = vpop.f32.mrf.mxu0
  %v1383 = vadd.f32 0.0, %v1382
  %v1384 = vpop.f32.mrf.mxu0
  %v1385 = vadd.f32 0.0, %v1384
  %1386 = vmatmul.bf16.gmra.mxu0 %v983
  %v1387 = vpop.f32.mrf.mxu0
  %v1388 = vadd.f32 0.0, %v1387
  %v1389 = vpop.f32.mrf.mxu0
  %v1390 = vadd.f32 0.0, %v1389
  %1391 = vmatmul.bf16.gmra.mxu0 %v992
  %v1392 = vpop.f32.mrf.mxu0
  %v1393 = vadd.f32 0.0, %v1392
  %v1394 = vpop.f32.mrf.mxu0
  %v1395 = vadd.f32 0.0, %v1394
  %1396 = vmatmul.bf16.gmra.mxu0 %v1001
  %v1397 = vpop.f32.mrf.mxu0
  %v1398 = vadd.f32 0.0, %v1397
  %v1399 = vpop.f32.mrf.mxu0
  %v1400 = vadd.f32 0.0, %v1399
  %1401 = vmatmul.bf16.gmra.mxu0 %v1010
  %v1402 = vpop.f32.mrf.mxu0
  %v1403 = vadd.f32 0.0, %v1402
  %v1404 = vpop.f32.mrf.mxu0
  %v1405 = vadd.f32 0.0, %v1404
  %1406 = vmatmul.bf16.gmra.mxu0 %v1019
  %v1407 = vpop.f32.mrf.mxu0
  %v1408 = vadd.f32 0.0, %v1407
  %v1409 = vpop.f32.mrf.mxu0
  %v1410 = vadd.f32 0.0, %v1409
  %1411 = vmatmul.bf16.gmra.mxu0 %v1028
  %v1412 = vpop.f32.mrf.mxu0
  %v1413 = vadd.f32 0.0, %v1412
  %v1414 = vpop.f32.mrf.mxu0
  %v1415 = vadd.f32 0.0, %v1414
  %1416 = vmatmul.bf16.gmra.mxu0 %v1037
  %v1417 = vpop.f32.mrf.mxu0
  %v1418 = vadd.f32 0.0, %v1417
  %v1419 = vpop.f32.mrf.mxu0
  %v1420 = vadd.f32 0.0, %v1419
  %1421 = vmatmul.bf16.gmra.mxu0 %v1046
  %v1422 = vpop.f32.mrf.mxu0
  %v1423 = vadd.f32 0.0, %v1422
  %v1424 = vpop.f32.mrf.mxu0
  %v1425 = vadd.f32 0.0, %v1424
  %1426 = vmatmul.bf16.gmra.mxu0 %v1055
  %v1427 = vpop.f32.mrf.mxu0
  %v1428 = vadd.f32 0.0, %v1427
  %v1429 = vpop.f32.mrf.mxu0
  %v1430 = vadd.f32 0.0, %v1429
  %1431 = vmatmul.bf16.gmra.mxu0 %v1064
  %v1432 = vpop.f32.mrf.mxu0
  %v1433 = vadd.f32 0.0, %v1432
  %v1434 = vpop.f32.mrf.mxu0
  %v1435 = vadd.f32 0.0, %v1434
  %1436 = vmatmul.bf16.gmra.mxu0 %v1073
  %v1437 = vpop.f32.mrf.mxu0
  %v1438 = vadd.f32 0.0, %v1437
  %v1439 = vpop.f32.mrf.mxu0
  %v1440 = vadd.f32 0.0, %v1439
  %1441 = vdwg.mxu0
  %1442 = vmatpush.bf16.msra.mxu0 %v1229
  %1443 = vmatpush.bf16.msra.mxu0 %v1228
  %1444 = vmatpush.bf16.msra.mxu0 %v1227
  %1445 = vmatpush.bf16.msra.mxu0 %v1226
  %1446 = vmatpush.bf16.msra.mxu0 %v1225
  %1447 = vmatpush.bf16.msra.mxu0 %v1224
  %1448 = vmatpush.bf16.msra.mxu0 %v1223
  %1449 = vmatpush.bf16.msra.mxu0 %v1222
  %1450 = vmatmul.bf16.gmra.mxu0 %v912
  %v1451 = vpop.f32.mrf.mxu0
  %v1452 = vadd.f32 %v1348, %v1451
  %v1453 = vpop.f32.mrf.mxu0
  %v1454 = vadd.f32 %v1350, %v1453
  %1455 = vmatmul.bf16.gmra.mxu0 %v921
  %v1456 = vpop.f32.mrf.mxu0
  %v1457 = vadd.f32 %v1353, %v1456
  %v1458 = vpop.f32.mrf.mxu0
  %v1459 = vadd.f32 %v1355, %v1458
  %1460 = vmatmul.bf16.gmra.mxu0 %v930
  %v1461 = vpop.f32.mrf.mxu0
  %v1462 = vadd.f32 %v1358, %v1461
  %v1463 = vpop.f32.mrf.mxu0
  %v1464 = vadd.f32 %v1360, %v1463
  %1465 = vmatmul.bf16.gmra.mxu0 %v939
  %v1466 = vpop.f32.mrf.mxu0
  %v1467 = vadd.f32 %v1363, %v1466
  %v1468 = vpop.f32.mrf.mxu0
  %v1469 = vadd.f32 %v1365, %v1468
  %1470 = vmatmul.bf16.gmra.mxu0 %v948
  %v1471 = vpop.f32.mrf.mxu0
  %v1472 = vadd.f32 %v1368, %v1471
  %v1473 = vpop.f32.mrf.mxu0
  %v1474 = vadd.f32 %v1370, %v1473
  %1475 = vmatmul.bf16.gmra.mxu0 %v957
  %v1476 = vpop.f32.mrf.mxu0
  %v1477 = vadd.f32 %v1373, %v1476
  %v1478 = vpop.f32.mrf.mxu0
  %v1479 = vadd.f32 %v1375, %v1478
  %1480 = vmatmul.bf16.gmra.mxu0 %v966
  %v1481 = vpop.f32.mrf.mxu0
  %v1482 = vadd.f32 %v1378, %v1481
  %v1483 = vpop.f32.mrf.mxu0
  %v1484 = vadd.f32 %v1380, %v1483
  %1485 = vmatmul.bf16.gmra.mxu0 %v975
  %v1486 = vpop.f32.mrf.mxu0
  %v1487 = vadd.f32 %v1383, %v1486
  %v1488 = vpop.f32.mrf.mxu0
  %v1489 = vadd.f32 %v1385, %v1488
  %1490 = vmatmul.bf16.gmra.mxu0 %v984
  %v1491 = vpop.f32.mrf.mxu0
  %v1492 = vadd.f32 %v1388, %v1491
  %v1493 = vpop.f32.mrf.mxu0
  %v1494 = vadd.f32 %v1390, %v1493
  %1495 = vmatmul.bf16.gmra.mxu0 %v993
  %v1496 = vpop.f32.mrf.mxu0
  %v1497 = vadd.f32 %v1393, %v1496
  %v1498 = vpop.f32.mrf.mxu0
  %v1499 = vadd.f32 %v1395, %v1498
  %1500 = vmatmul.bf16.gmra.mxu0 %v1002
  %v1501 = vpop.f32.mrf.mxu0
  %v1502 = vadd.f32 %v1398, %v1501
  %v1503 = vpop.f32.mrf.mxu0
  %v1504 = vadd.f32 %v1400, %v1503
  %1505 = vmatmul.bf16.gmra.mxu0 %v1011
  %v1506 = vpop.f32.mrf.mxu0
  %v1507 = vadd.f32 %v1403, %v1506
  %v1508 = vpop.f32.mrf.mxu0
  %v1509 = vadd.f32 %v1405, %v1508
  %1510 = vmatmul.bf16.gmra.mxu0 %v1020
  %v1511 = vpop.f32.mrf.mxu0
  %v1512 = vadd.f32 %v1408, %v1511
  %v1513 = vpop.f32.mrf.mxu0
  %v1514 = vadd.f32 %v1410, %v1513
  %1515 = vmatmul.bf16.gmra.mxu0 %v1029
  %v1516 = vpop.f32.mrf.mxu0
  %v1517 = vadd.f32 %v1413, %v1516
  %v1518 = vpop.f32.mrf.mxu0
  %v1519 = vadd.f32 %v1415, %v1518
  %1520 = vmatmul.bf16.gmra.mxu0 %v1038
  %v1521 = vpop.f32.mrf.mxu0
  %v1522 = vadd.f32 %v1418, %v1521
  %v1523 = vpop.f32.mrf.mxu0
  %v1524 = vadd.f32 %v1420, %v1523
  %1525 = vmatmul.bf16.gmra.mxu0 %v1047
  %v1526 = vpop.f32.mrf.mxu0
  %v1527 = vadd.f32 %v1423, %v1526
  %v1528 = vpop.f32.mrf.mxu0
  %v1529 = vadd.f32 %v1425, %v1528
  %1530 = vmatmul.bf16.gmra.mxu0 %v1056
  %v1531 = vpop.f32.mrf.mxu0
  %v1532 = vadd.f32 %v1428, %v1531
  %v1533 = vpop.f32.mrf.mxu0
  %v1534 = vadd.f32 %v1430, %v1533
  %1535 = vmatmul.bf16.gmra.mxu0 %v1065
  %v1536 = vpop.f32.mrf.mxu0
  %v1537 = vadd.f32 %v1433, %v1536
  %v1538 = vpop.f32.mrf.mxu0
  %v1539 = vadd.f32 %v1435, %v1538
  %1540 = vmatmul.bf16.gmra.mxu0 %v1074
  %v1541 = vpop.f32.mrf.mxu0
  %v1542 = vadd.f32 %v1438, %v1541
  %v1543 = vpop.f32.mrf.mxu0
  %v1544 = vadd.f32 %v1440, %v1543
  %1545 = vdwg.mxu0
  %1546 = vmatpush.bf16.msra.mxu0 %v1237
  %1547 = vmatpush.bf16.msra.mxu0 %v1236
  %1548 = vmatpush.bf16.msra.mxu0 %v1235
  %1549 = vmatpush.bf16.msra.mxu0 %v1234
  %1550 = vmatpush.bf16.msra.mxu0 %v1233
  %1551 = vmatpush.bf16.msra.mxu0 %v1232
  %1552 = vmatpush.bf16.msra.mxu0 %v1231
  %1553 = vmatpush.bf16.msra.mxu0 %v1230
  %1554 = vmatmul.bf16.gmra.mxu0 %v913
  %v1555 = vpop.f32.mrf.mxu0
  %v1556 = vadd.f32 %v1452, %v1555
  %v1557 = vpop.f32.mrf.mxu0
  %v1558 = vadd.f32 %v1454, %v1557
  %1559 = vmatmul.bf16.gmra.mxu0 %v922
  %v1560 = vpop.f32.mrf.mxu0
  %v1561 = vadd.f32 %v1457, %v1560
  %v1562 = vpop.f32.mrf.mxu0
  %v1563 = vadd.f32 %v1459, %v1562
  %1564 = vmatmul.bf16.gmra.mxu0 %v931
  %v1565 = vpop.f32.mrf.mxu0
  %v1566 = vadd.f32 %v1462, %v1565
  %v1567 = vpop.f32.mrf.mxu0
  %v1568 = vadd.f32 %v1464, %v1567
  %1569 = vmatmul.bf16.gmra.mxu0 %v940
  %v1570 = vpop.f32.mrf.mxu0
  %v1571 = vadd.f32 %v1467, %v1570
  %v1572 = vpop.f32.mrf.mxu0
  %v1573 = vadd.f32 %v1469, %v1572
  %1574 = vmatmul.bf16.gmra.mxu0 %v949
  %v1575 = vpop.f32.mrf.mxu0
  %v1576 = vadd.f32 %v1472, %v1575
  %v1577 = vpop.f32.mrf.mxu0
  %v1578 = vadd.f32 %v1474, %v1577
  %1579 = vmatmul.bf16.gmra.mxu0 %v958
  %v1580 = vpop.f32.mrf.mxu0
  %v1581 = vadd.f32 %v1477, %v1580
  %v1582 = vpop.f32.mrf.mxu0
  %v1583 = vadd.f32 %v1479, %v1582
  %1584 = vmatmul.bf16.gmra.mxu0 %v967
  %v1585 = vpop.f32.mrf.mxu0
  %v1586 = vadd.f32 %v1482, %v1585
  %v1587 = vpop.f32.mrf.mxu0
  %v1588 = vadd.f32 %v1484, %v1587
  %1589 = vmatmul.bf16.gmra.mxu0 %v976
  %v1590 = vpop.f32.mrf.mxu0
  %v1591 = vadd.f32 %v1487, %v1590
  %v1592 = vpop.f32.mrf.mxu0
  %v1593 = vadd.f32 %v1489, %v1592
  %1594 = vmatmul.bf16.gmra.mxu0 %v985
  %v1595 = vpop.f32.mrf.mxu0
  %v1596 = vadd.f32 %v1492, %v1595
  %v1597 = vpop.f32.mrf.mxu0
  %v1598 = vadd.f32 %v1494, %v1597
  %1599 = vmatmul.bf16.gmra.mxu0 %v994
  %v1600 = vpop.f32.mrf.mxu0
  %v1601 = vadd.f32 %v1497, %v1600
  %v1602 = vpop.f32.mrf.mxu0
  %v1603 = vadd.f32 %v1499, %v1602
  %1604 = vmatmul.bf16.gmra.mxu0 %v1003
  %v1605 = vpop.f32.mrf.mxu0
  %v1606 = vadd.f32 %v1502, %v1605
  %v1607 = vpop.f32.mrf.mxu0
  %v1608 = vadd.f32 %v1504, %v1607
  %1609 = vmatmul.bf16.gmra.mxu0 %v1012
  %v1610 = vpop.f32.mrf.mxu0
  %v1611 = vadd.f32 %v1507, %v1610
  %v1612 = vpop.f32.mrf.mxu0
  %v1613 = vadd.f32 %v1509, %v1612
  %1614 = vmatmul.bf16.gmra.mxu0 %v1021
  %v1615 = vpop.f32.mrf.mxu0
  %v1616 = vadd.f32 %v1512, %v1615
  %v1617 = vpop.f32.mrf.mxu0
  %v1618 = vadd.f32 %v1514, %v1617
  %1619 = vmatmul.bf16.gmra.mxu0 %v1030
  %v1620 = vpop.f32.mrf.mxu0
  %v1621 = vadd.f32 %v1517, %v1620
  %v1622 = vpop.f32.mrf.mxu0
  %v1623 = vadd.f32 %v1519, %v1622
  %1624 = vmatmul.bf16.gmra.mxu0 %v1039
  %v1625 = vpop.f32.mrf.mxu0
  %v1626 = vadd.f32 %v1522, %v1625
  %v1627 = vpop.f32.mrf.mxu0
  %v1628 = vadd.f32 %v1524, %v1627
  %1629 = vmatmul.bf16.gmra.mxu0 %v1048
  %v1630 = vpop.f32.mrf.mxu0
  %v1631 = vadd.f32 %v1527, %v1630
  %v1632 = vpop.f32.mrf.mxu0
  %v1633 = vadd.f32 %v1529, %v1632
  %1634 = vmatmul.bf16.gmra.mxu0 %v1057
  %v1635 = vpop.f32.mrf.mxu0
  %v1636 = vadd.f32 %v1532, %v1635
  %v1637 = vpop.f32.mrf.mxu0
  %v1638 = vadd.f32 %v1534, %v1637
  %1639 = vmatmul.bf16.gmra.mxu0 %v1066
  %v1640 = vpop.f32.mrf.mxu0
  %v1641 = vadd.f32 %v1537, %v1640
  %v1642 = vpop.f32.mrf.mxu0
  %v1643 = vadd.f32 %v1539, %v1642
  %1644 = vmatmul.bf16.gmra.mxu0 %v1075
  %v1645 = vpop.f32.mrf.mxu0
  %v1646 = vadd.f32 %v1542, %v1645
  %v1647 = vpop.f32.mrf.mxu0
  %v1648 = vadd.f32 %v1544, %v1647
  %1649 = vdwg.mxu0
  %1650 = vmatpush.bf16.msra.mxu0 %v1245
  %1651 = vmatpush.bf16.msra.mxu0 %v1244
  %1652 = vmatpush.bf16.msra.mxu0 %v1243
  %1653 = vmatpush.bf16.msra.mxu0 %v1242
  %1654 = vmatpush.bf16.msra.mxu0 %v1241
  %1655 = vmatpush.bf16.msra.mxu0 %v1240
  %1656 = vmatpush.bf16.msra.mxu0 %v1239
  %1657 = vmatpush.bf16.msra.mxu0 %v1238
  %1658 = vmatmul.bf16.gmra.mxu0 %v914
  %v1659 = vpop.f32.mrf.mxu0
  %v1660 = vadd.f32 %v1556, %v1659
  %v1661 = vpop.f32.mrf.mxu0
  %v1662 = vadd.f32 %v1558, %v1661
  %1663 = vmatmul.bf16.gmra.mxu0 %v923
  %v1664 = vpop.f32.mrf.mxu0
  %v1665 = vadd.f32 %v1561, %v1664
  %v1666 = vpop.f32.mrf.mxu0
  %v1667 = vadd.f32 %v1563, %v1666
  %1668 = vmatmul.bf16.gmra.mxu0 %v932
  %v1669 = vpop.f32.mrf.mxu0
  %v1670 = vadd.f32 %v1566, %v1669
  %v1671 = vpop.f32.mrf.mxu0
  %v1672 = vadd.f32 %v1568, %v1671
  %1673 = vmatmul.bf16.gmra.mxu0 %v941
  %v1674 = vpop.f32.mrf.mxu0
  %v1675 = vadd.f32 %v1571, %v1674
  %v1676 = vpop.f32.mrf.mxu0
  %v1677 = vadd.f32 %v1573, %v1676
  %1678 = vmatmul.bf16.gmra.mxu0 %v950
  %v1679 = vpop.f32.mrf.mxu0
  %v1680 = vadd.f32 %v1576, %v1679
  %v1681 = vpop.f32.mrf.mxu0
  %v1682 = vadd.f32 %v1578, %v1681
  %1683 = vmatmul.bf16.gmra.mxu0 %v959
  %v1684 = vpop.f32.mrf.mxu0
  %v1685 = vadd.f32 %v1581, %v1684
  %v1686 = vpop.f32.mrf.mxu0
  %v1687 = vadd.f32 %v1583, %v1686
  %1688 = vmatmul.bf16.gmra.mxu0 %v968
  %v1689 = vpop.f32.mrf.mxu0
  %v1690 = vadd.f32 %v1586, %v1689
  %v1691 = vpop.f32.mrf.mxu0
  %v1692 = vadd.f32 %v1588, %v1691
  %1693 = vmatmul.bf16.gmra.mxu0 %v977
  %v1694 = vpop.f32.mrf.mxu0
  %v1695 = vadd.f32 %v1591, %v1694
  %v1696 = vpop.f32.mrf.mxu0
  %v1697 = vadd.f32 %v1593, %v1696
  %1698 = vmatmul.bf16.gmra.mxu0 %v986
  %v1699 = vpop.f32.mrf.mxu0
  %v1700 = vadd.f32 %v1596, %v1699
  %v1701 = vpop.f32.mrf.mxu0
  %v1702 = vadd.f32 %v1598, %v1701
  %1703 = vmatmul.bf16.gmra.mxu0 %v995
  %v1704 = vpop.f32.mrf.mxu0
  %v1705 = vadd.f32 %v1601, %v1704
  %v1706 = vpop.f32.mrf.mxu0
  %v1707 = vadd.f32 %v1603, %v1706
  %1708 = vmatmul.bf16.gmra.mxu0 %v1004
  %v1709 = vpop.f32.mrf.mxu0
  %v1710 = vadd.f32 %v1606, %v1709
  %v1711 = vpop.f32.mrf.mxu0
  %v1712 = vadd.f32 %v1608, %v1711
  %1713 = vmatmul.bf16.gmra.mxu0 %v1013
  %v1714 = vpop.f32.mrf.mxu0
  %v1715 = vadd.f32 %v1611, %v1714
  %v1716 = vpop.f32.mrf.mxu0
  %v1717 = vadd.f32 %v1613, %v1716
  %1718 = vmatmul.bf16.gmra.mxu0 %v1022
  %v1719 = vpop.f32.mrf.mxu0
  %v1720 = vadd.f32 %v1616, %v1719
  %v1721 = vpop.f32.mrf.mxu0
  %v1722 = vadd.f32 %v1618, %v1721
  %1723 = vmatmul.bf16.gmra.mxu0 %v1031
  %v1724 = vpop.f32.mrf.mxu0
  %v1725 = vadd.f32 %v1621, %v1724
  %v1726 = vpop.f32.mrf.mxu0
  %v1727 = vadd.f32 %v1623, %v1726
  %1728 = vmatmul.bf16.gmra.mxu0 %v1040
  %v1729 = vpop.f32.mrf.mxu0
  %v1730 = vadd.f32 %v1626, %v1729
  %v1731 = vpop.f32.mrf.mxu0
  %v1732 = vadd.f32 %v1628, %v1731
  %1733 = vmatmul.bf16.gmra.mxu0 %v1049
  %v1734 = vpop.f32.mrf.mxu0
  %v1735 = vadd.f32 %v1631, %v1734
  %v1736 = vpop.f32.mrf.mxu0
  %v1737 = vadd.f32 %v1633, %v1736
  %1738 = vmatmul.bf16.gmra.mxu0 %v1058
  %v1739 = vpop.f32.mrf.mxu0
  %v1740 = vadd.f32 %v1636, %v1739
  %v1741 = vpop.f32.mrf.mxu0
  %v1742 = vadd.f32 %v1638, %v1741
  %1743 = vmatmul.bf16.gmra.mxu0 %v1067
  %v1744 = vpop.f32.mrf.mxu0
  %v1745 = vadd.f32 %v1641, %v1744
  %v1746 = vpop.f32.mrf.mxu0
  %v1747 = vadd.f32 %v1643, %v1746
  %1748 = vmatmul.bf16.gmra.mxu0 %v1076
  %v1749 = vpop.f32.mrf.mxu0
  %v1750 = vadd.f32 %v1646, %v1749
  %v1751 = vpop.f32.mrf.mxu0
  %v1752 = vadd.f32 %v1648, %v1751
  %1753 = vdwg.mxu0
  %1754 = vmatpush.bf16.msra.mxu0 %v1253
  %1755 = vmatpush.bf16.msra.mxu0 %v1252
  %1756 = vmatpush.bf16.msra.mxu0 %v1251
  %1757 = vmatpush.bf16.msra.mxu0 %v1250
  %1758 = vmatpush.bf16.msra.mxu0 %v1249
  %1759 = vmatpush.bf16.msra.mxu0 %v1248
  %1760 = vmatpush.bf16.msra.mxu0 %v1247
  %1761 = vmatpush.bf16.msra.mxu0 %v1246
  %1762 = vmatmul.bf16.gmra.mxu0 %v915
  %v1763 = vpop.f32.mrf.mxu0
  %v1764 = vadd.f32 %v1660, %v1763
  %v1765 = vpop.f32.mrf.mxu0
  %v1766 = vadd.f32 %v1662, %v1765
  %1767 = vmatmul.bf16.gmra.mxu0 %v924
  %v1768 = vpop.f32.mrf.mxu0
  %v1769 = vadd.f32 %v1665, %v1768
  %v1770 = vpop.f32.mrf.mxu0
  %v1771 = vadd.f32 %v1667, %v1770
  %1772 = vmatmul.bf16.gmra.mxu0 %v933
  %v1773 = vpop.f32.mrf.mxu0
  %v1774 = vadd.f32 %v1670, %v1773
  %v1775 = vpop.f32.mrf.mxu0
  %v1776 = vadd.f32 %v1672, %v1775
  %1777 = vmatmul.bf16.gmra.mxu0 %v942
  %v1778 = vpop.f32.mrf.mxu0
  %v1779 = vadd.f32 %v1675, %v1778
  %v1780 = vpop.f32.mrf.mxu0
  %v1781 = vadd.f32 %v1677, %v1780
  %1782 = vmatmul.bf16.gmra.mxu0 %v951
  %v1783 = vpop.f32.mrf.mxu0
  %v1784 = vadd.f32 %v1680, %v1783
  %v1785 = vpop.f32.mrf.mxu0
  %v1786 = vadd.f32 %v1682, %v1785
  %1787 = vmatmul.bf16.gmra.mxu0 %v960
  %v1788 = vpop.f32.mrf.mxu0
  %v1789 = vadd.f32 %v1685, %v1788
  %v1790 = vpop.f32.mrf.mxu0
  %v1791 = vadd.f32 %v1687, %v1790
  %1792 = vmatmul.bf16.gmra.mxu0 %v969
  %v1793 = vpop.f32.mrf.mxu0
  %v1794 = vadd.f32 %v1690, %v1793
  %v1795 = vpop.f32.mrf.mxu0
  %v1796 = vadd.f32 %v1692, %v1795
  %1797 = vmatmul.bf16.gmra.mxu0 %v978
  %v1798 = vpop.f32.mrf.mxu0
  %v1799 = vadd.f32 %v1695, %v1798
  %v1800 = vpop.f32.mrf.mxu0
  %v1801 = vadd.f32 %v1697, %v1800
  %1802 = vmatmul.bf16.gmra.mxu0 %v987
  %v1803 = vpop.f32.mrf.mxu0
  %v1804 = vadd.f32 %v1700, %v1803
  %v1805 = vpop.f32.mrf.mxu0
  %v1806 = vadd.f32 %v1702, %v1805
  %1807 = vmatmul.bf16.gmra.mxu0 %v996
  %v1808 = vpop.f32.mrf.mxu0
  %v1809 = vadd.f32 %v1705, %v1808
  %v1810 = vpop.f32.mrf.mxu0
  %v1811 = vadd.f32 %v1707, %v1810
  %1812 = vmatmul.bf16.gmra.mxu0 %v1005
  %v1813 = vpop.f32.mrf.mxu0
  %v1814 = vadd.f32 %v1710, %v1813
  %v1815 = vpop.f32.mrf.mxu0
  %v1816 = vadd.f32 %v1712, %v1815
  %1817 = vmatmul.bf16.gmra.mxu0 %v1014
  %v1818 = vpop.f32.mrf.mxu0
  %v1819 = vadd.f32 %v1715, %v1818
  %v1820 = vpop.f32.mrf.mxu0
  %v1821 = vadd.f32 %v1717, %v1820
  %1822 = vmatmul.bf16.gmra.mxu0 %v1023
  %v1823 = vpop.f32.mrf.mxu0
  %v1824 = vadd.f32 %v1720, %v1823
  %v1825 = vpop.f32.mrf.mxu0
  %v1826 = vadd.f32 %v1722, %v1825
  %1827 = vmatmul.bf16.gmra.mxu0 %v1032
  %v1828 = vpop.f32.mrf.mxu0
  %v1829 = vadd.f32 %v1725, %v1828
  %v1830 = vpop.f32.mrf.mxu0
  %v1831 = vadd.f32 %v1727, %v1830
  %1832 = vmatmul.bf16.gmra.mxu0 %v1041
  %v1833 = vpop.f32.mrf.mxu0
  %v1834 = vadd.f32 %v1730, %v1833
  %v1835 = vpop.f32.mrf.mxu0
  %v1836 = vadd.f32 %v1732, %v1835
  %1837 = vmatmul.bf16.gmra.mxu0 %v1050
  %v1838 = vpop.f32.mrf.mxu0
  %v1839 = vadd.f32 %v1735, %v1838
  %v1840 = vpop.f32.mrf.mxu0
  %v1841 = vadd.f32 %v1737, %v1840
  %1842 = vmatmul.bf16.gmra.mxu0 %v1059
  %v1843 = vpop.f32.mrf.mxu0
  %v1844 = vadd.f32 %v1740, %v1843
  %v1845 = vpop.f32.mrf.mxu0
  %v1846 = vadd.f32 %v1742, %v1845
  %1847 = vmatmul.bf16.gmra.mxu0 %v1068
  %v1848 = vpop.f32.mrf.mxu0
  %v1849 = vadd.f32 %v1745, %v1848
  %v1850 = vpop.f32.mrf.mxu0
  %v1851 = vadd.f32 %v1747, %v1850
  %1852 = vmatmul.bf16.gmra.mxu0 %v1077
  %v1853 = vpop.f32.mrf.mxu0
  %v1854 = vadd.f32 %v1750, %v1853
  %v1855 = vpop.f32.mrf.mxu0
  %v1856 = vadd.f32 %v1752, %v1855
  %1857 = vdwg.mxu0
  %1858 = vmatpush.bf16.msra.mxu0 %v1261
  %1859 = vmatpush.bf16.msra.mxu0 %v1260
  %1860 = vmatpush.bf16.msra.mxu0 %v1259
  %1861 = vmatpush.bf16.msra.mxu0 %v1258
  %1862 = vmatpush.bf16.msra.mxu0 %v1257
  %1863 = vmatpush.bf16.msra.mxu0 %v1256
  %1864 = vmatpush.bf16.msra.mxu0 %v1255
  %1865 = vmatpush.bf16.msra.mxu0 %v1254
  %1866 = vmatmul.bf16.gmra.mxu0 %v916
  %v1867 = vpop.f32.mrf.mxu0
  %v1868 = vadd.f32 %v1764, %v1867
  %v1869 = vpop.f32.mrf.mxu0
  %v1870 = vadd.f32 %v1766, %v1869
  %1871 = vmatmul.bf16.gmra.mxu0 %v925
  %v1872 = vpop.f32.mrf.mxu0
  %v1873 = vadd.f32 %v1769, %v1872
  %v1874 = vpop.f32.mrf.mxu0
  %v1875 = vadd.f32 %v1771, %v1874
  %1876 = vmatmul.bf16.gmra.mxu0 %v934
  %v1877 = vpop.f32.mrf.mxu0
  %v1878 = vadd.f32 %v1774, %v1877
  %v1879 = vpop.f32.mrf.mxu0
  %v1880 = vadd.f32 %v1776, %v1879
  %1881 = vmatmul.bf16.gmra.mxu0 %v943
  %v1882 = vpop.f32.mrf.mxu0
  %v1883 = vadd.f32 %v1779, %v1882
  %v1884 = vpop.f32.mrf.mxu0
  %v1885 = vadd.f32 %v1781, %v1884
  %1886 = vmatmul.bf16.gmra.mxu0 %v952
  %v1887 = vpop.f32.mrf.mxu0
  %v1888 = vadd.f32 %v1784, %v1887
  %v1889 = vpop.f32.mrf.mxu0
  %v1890 = vadd.f32 %v1786, %v1889
  %1891 = vmatmul.bf16.gmra.mxu0 %v961
  %v1892 = vpop.f32.mrf.mxu0
  %v1893 = vadd.f32 %v1789, %v1892
  %v1894 = vpop.f32.mrf.mxu0
  %v1895 = vadd.f32 %v1791, %v1894
  %1896 = vmatmul.bf16.gmra.mxu0 %v970
  %v1897 = vpop.f32.mrf.mxu0
  %v1898 = vadd.f32 %v1794, %v1897
  %v1899 = vpop.f32.mrf.mxu0
  %v1900 = vadd.f32 %v1796, %v1899
  %1901 = vmatmul.bf16.gmra.mxu0 %v979
  %v1902 = vpop.f32.mrf.mxu0
  %v1903 = vadd.f32 %v1799, %v1902
  %v1904 = vpop.f32.mrf.mxu0
  %v1905 = vadd.f32 %v1801, %v1904
  %1906 = vmatmul.bf16.gmra.mxu0 %v988
  %v1907 = vpop.f32.mrf.mxu0
  %v1908 = vadd.f32 %v1804, %v1907
  %v1909 = vpop.f32.mrf.mxu0
  %v1910 = vadd.f32 %v1806, %v1909
  %1911 = vmatmul.bf16.gmra.mxu0 %v997
  %v1912 = vpop.f32.mrf.mxu0
  %v1913 = vadd.f32 %v1809, %v1912
  %v1914 = vpop.f32.mrf.mxu0
  %v1915 = vadd.f32 %v1811, %v1914
  %1916 = vmatmul.bf16.gmra.mxu0 %v1006
  %v1917 = vpop.f32.mrf.mxu0
  %v1918 = vadd.f32 %v1814, %v1917
  %v1919 = vpop.f32.mrf.mxu0
  %v1920 = vadd.f32 %v1816, %v1919
  %1921 = vmatmul.bf16.gmra.mxu0 %v1015
  %v1922 = vpop.f32.mrf.mxu0
  %v1923 = vadd.f32 %v1819, %v1922
  %v1924 = vpop.f32.mrf.mxu0
  %v1925 = vadd.f32 %v1821, %v1924
  %1926 = vmatmul.bf16.gmra.mxu0 %v1024
  %v1927 = vpop.f32.mrf.mxu0
  %v1928 = vadd.f32 %v1824, %v1927
  %v1929 = vpop.f32.mrf.mxu0
  %v1930 = vadd.f32 %v1826, %v1929
  %1931 = vmatmul.bf16.gmra.mxu0 %v1033
  %v1932 = vpop.f32.mrf.mxu0
  %v1933 = vadd.f32 %v1829, %v1932
  %v1934 = vpop.f32.mrf.mxu0
  %v1935 = vadd.f32 %v1831, %v1934
  %1936 = vmatmul.bf16.gmra.mxu0 %v1042
  %v1937 = vpop.f32.mrf.mxu0
  %v1938 = vadd.f32 %v1834, %v1937
  %v1939 = vpop.f32.mrf.mxu0
  %v1940 = vadd.f32 %v1836, %v1939
  %1941 = vmatmul.bf16.gmra.mxu0 %v1051
  %v1942 = vpop.f32.mrf.mxu0
  %v1943 = vadd.f32 %v1839, %v1942
  %v1944 = vpop.f32.mrf.mxu0
  %v1945 = vadd.f32 %v1841, %v1944
  %1946 = vmatmul.bf16.gmra.mxu0 %v1060
  %v1947 = vpop.f32.mrf.mxu0
  %v1948 = vadd.f32 %v1844, %v1947
  %v1949 = vpop.f32.mrf.mxu0
  %v1950 = vadd.f32 %v1846, %v1949
  %1951 = vmatmul.bf16.gmra.mxu0 %v1069
  %v1952 = vpop.f32.mrf.mxu0
  %v1953 = vadd.f32 %v1849, %v1952
  %v1954 = vpop.f32.mrf.mxu0
  %v1955 = vadd.f32 %v1851, %v1954
  %1956 = vmatmul.bf16.gmra.mxu0 %v1078
  %v1957 = vpop.f32.mrf.mxu0
  %v1958 = vadd.f32 %v1854, %v1957
  %v1959 = vpop.f32.mrf.mxu0
  %v1960 = vadd.f32 %v1856, %v1959
  %1961 = vdwg.mxu0
  %1962 = vmatpush.bf16.msra.mxu0 %v1269
  %1963 = vmatpush.bf16.msra.mxu0 %v1268
  %1964 = vmatpush.bf16.msra.mxu0 %v1267
  %1965 = vmatpush.bf16.msra.mxu0 %v1266
  %1966 = vmatpush.bf16.msra.mxu0 %v1265
  %1967 = vmatpush.bf16.msra.mxu0 %v1264
  %1968 = vmatpush.bf16.msra.mxu0 %v1263
  %1969 = vmatpush.bf16.msra.mxu0 %v1262
  %1970 = vmatmul.bf16.gmra.mxu0 %v917
  %v1971 = vpop.f32.mrf.mxu0
  %v1972 = vadd.f32 %v1868, %v1971
  %v1973 = vpop.f32.mrf.mxu0
  %v1974 = vadd.f32 %v1870, %v1973
  %1975 = vmatmul.bf16.gmra.mxu0 %v926
  %v1976 = vpop.f32.mrf.mxu0
  %v1977 = vadd.f32 %v1873, %v1976
  %v1978 = vpop.f32.mrf.mxu0
  %v1979 = vadd.f32 %v1875, %v1978
  %1980 = vmatmul.bf16.gmra.mxu0 %v935
  %v1981 = vpop.f32.mrf.mxu0
  %v1982 = vadd.f32 %v1878, %v1981
  %v1983 = vpop.f32.mrf.mxu0
  %v1984 = vadd.f32 %v1880, %v1983
  %1985 = vmatmul.bf16.gmra.mxu0 %v944
  %v1986 = vpop.f32.mrf.mxu0
  %v1987 = vadd.f32 %v1883, %v1986
  %v1988 = vpop.f32.mrf.mxu0
  %v1989 = vadd.f32 %v1885, %v1988
  %1990 = vmatmul.bf16.gmra.mxu0 %v953
  %v1991 = vpop.f32.mrf.mxu0
  %v1992 = vadd.f32 %v1888, %v1991
  %v1993 = vpop.f32.mrf.mxu0
  %v1994 = vadd.f32 %v1890, %v1993
  %1995 = vmatmul.bf16.gmra.mxu0 %v962
  %v1996 = vpop.f32.mrf.mxu0
  %v1997 = vadd.f32 %v1893, %v1996
  %v1998 = vpop.f32.mrf.mxu0
  %v1999 = vadd.f32 %v1895, %v1998
  %2000 = vmatmul.bf16.gmra.mxu0 %v971
  %v2001 = vpop.f32.mrf.mxu0
  %v2002 = vadd.f32 %v1898, %v2001
  %v2003 = vpop.f32.mrf.mxu0
  %v2004 = vadd.f32 %v1900, %v2003
  %2005 = vmatmul.bf16.gmra.mxu0 %v980
  %v2006 = vpop.f32.mrf.mxu0
  %v2007 = vadd.f32 %v1903, %v2006
  %v2008 = vpop.f32.mrf.mxu0
  %v2009 = vadd.f32 %v1905, %v2008
  %2010 = vmatmul.bf16.gmra.mxu0 %v989
  %v2011 = vpop.f32.mrf.mxu0
  %v2012 = vadd.f32 %v1908, %v2011
  %v2013 = vpop.f32.mrf.mxu0
  %v2014 = vadd.f32 %v1910, %v2013
  %2015 = vmatmul.bf16.gmra.mxu0 %v998
  %v2016 = vpop.f32.mrf.mxu0
  %v2017 = vadd.f32 %v1913, %v2016
  %v2018 = vpop.f32.mrf.mxu0
  %v2019 = vadd.f32 %v1915, %v2018
  %2020 = vmatmul.bf16.gmra.mxu0 %v1007
  %v2021 = vpop.f32.mrf.mxu0
  %v2022 = vadd.f32 %v1918, %v2021
  %v2023 = vpop.f32.mrf.mxu0
  %v2024 = vadd.f32 %v1920, %v2023
  %2025 = vmatmul.bf16.gmra.mxu0 %v1016
  %v2026 = vpop.f32.mrf.mxu0
  %v2027 = vadd.f32 %v1923, %v2026
  %v2028 = vpop.f32.mrf.mxu0
  %v2029 = vadd.f32 %v1925, %v2028
  %2030 = vmatmul.bf16.gmra.mxu0 %v1025
  %v2031 = vpop.f32.mrf.mxu0
  %v2032 = vadd.f32 %v1928, %v2031
  %v2033 = vpop.f32.mrf.mxu0
  %v2034 = vadd.f32 %v1930, %v2033
  %2035 = vmatmul.bf16.gmra.mxu0 %v1034
  %v2036 = vpop.f32.mrf.mxu0
  %v2037 = vadd.f32 %v1933, %v2036
  %v2038 = vpop.f32.mrf.mxu0
  %v2039 = vadd.f32 %v1935, %v2038
  %2040 = vmatmul.bf16.gmra.mxu0 %v1043
  %v2041 = vpop.f32.mrf.mxu0
  %v2042 = vadd.f32 %v1938, %v2041
  %v2043 = vpop.f32.mrf.mxu0
  %v2044 = vadd.f32 %v1940, %v2043
  %2045 = vmatmul.bf16.gmra.mxu0 %v1052
  %v2046 = vpop.f32.mrf.mxu0
  %v2047 = vadd.f32 %v1943, %v2046
  %v2048 = vpop.f32.mrf.mxu0
  %v2049 = vadd.f32 %v1945, %v2048
  %2050 = vmatmul.bf16.gmra.mxu0 %v1061
  %v2051 = vpop.f32.mrf.mxu0
  %v2052 = vadd.f32 %v1948, %v2051
  %v2053 = vpop.f32.mrf.mxu0
  %v2054 = vadd.f32 %v1950, %v2053
  %2055 = vmatmul.bf16.gmra.mxu0 %v1070
  %v2056 = vpop.f32.mrf.mxu0
  %v2057 = vadd.f32 %v1953, %v2056
  %v2058 = vpop.f32.mrf.mxu0
  %v2059 = vadd.f32 %v1955, %v2058
  %2060 = vmatmul.bf16.gmra.mxu0 %v1079
  %v2061 = vpop.f32.mrf.mxu0
  %v2062 = vadd.f32 %v1958, %v2061
  %v2063 = vpop.f32.mrf.mxu0
  %v2064 = vadd.f32 %v1960, %v2063
  %2065 = vdwg.mxu0
  %2066 = vmatpush.bf16.msra.mxu0 %v1277
  %2067 = vmatpush.bf16.msra.mxu0 %v1276
  %2068 = vmatpush.bf16.msra.mxu0 %v1275
  %2069 = vmatpush.bf16.msra.mxu0 %v1274
  %2070 = vmatpush.bf16.msra.mxu0 %v1273
  %2071 = vmatpush.bf16.msra.mxu0 %v1272
  %2072 = vmatpush.bf16.msra.mxu0 %v1271
  %2073 = vmatpush.bf16.msra.mxu0 %v1270
  %2074 = vmatmul.bf16.gmra.mxu0 %v918
  %v2075 = vpop.f32.mrf.mxu0
  %v2076 = vadd.f32 %v1972, %v2075
  %v2077 = vpop.f32.mrf.mxu0
  %v2078 = vadd.f32 %v1974, %v2077
  %2079 = vmatmul.bf16.gmra.mxu0 %v927
  %v2080 = vpop.f32.mrf.mxu0
  %v2081 = vadd.f32 %v1977, %v2080
  %v2082 = vpop.f32.mrf.mxu0
  %v2083 = vadd.f32 %v1979, %v2082
  %2084 = vmatmul.bf16.gmra.mxu0 %v936
  %v2085 = vpop.f32.mrf.mxu0
  %v2086 = vadd.f32 %v1982, %v2085
  %v2087 = vpop.f32.mrf.mxu0
  %v2088 = vadd.f32 %v1984, %v2087
  %2089 = vmatmul.bf16.gmra.mxu0 %v945
  %v2090 = vpop.f32.mrf.mxu0
  %v2091 = vadd.f32 %v1987, %v2090
  %v2092 = vpop.f32.mrf.mxu0
  %v2093 = vadd.f32 %v1989, %v2092
  %2094 = vmatmul.bf16.gmra.mxu0 %v954
  %v2095 = vpop.f32.mrf.mxu0
  %v2096 = vadd.f32 %v1992, %v2095
  %v2097 = vpop.f32.mrf.mxu0
  %v2098 = vadd.f32 %v1994, %v2097
  %2099 = vmatmul.bf16.gmra.mxu0 %v963
  %v2100 = vpop.f32.mrf.mxu0
  %v2101 = vadd.f32 %v1997, %v2100
  %v2102 = vpop.f32.mrf.mxu0
  %v2103 = vadd.f32 %v1999, %v2102
  %2104 = vmatmul.bf16.gmra.mxu0 %v972
  %v2105 = vpop.f32.mrf.mxu0
  %v2106 = vadd.f32 %v2002, %v2105
  %v2107 = vpop.f32.mrf.mxu0
  %v2108 = vadd.f32 %v2004, %v2107
  %2109 = vmatmul.bf16.gmra.mxu0 %v981
  %v2110 = vpop.f32.mrf.mxu0
  %v2111 = vadd.f32 %v2007, %v2110
  %v2112 = vpop.f32.mrf.mxu0
  %v2113 = vadd.f32 %v2009, %v2112
  %2114 = vmatmul.bf16.gmra.mxu0 %v990
  %v2115 = vpop.f32.mrf.mxu0
  %v2116 = vadd.f32 %v2012, %v2115
  %v2117 = vpop.f32.mrf.mxu0
  %v2118 = vadd.f32 %v2014, %v2117
  %2119 = vmatmul.bf16.gmra.mxu0 %v999
  %v2120 = vpop.f32.mrf.mxu0
  %v2121 = vadd.f32 %v2017, %v2120
  %v2122 = vpop.f32.mrf.mxu0
  %v2123 = vadd.f32 %v2019, %v2122
  %2124 = vmatmul.bf16.gmra.mxu0 %v1008
  %v2125 = vpop.f32.mrf.mxu0
  %v2126 = vadd.f32 %v2022, %v2125
  %v2127 = vpop.f32.mrf.mxu0
  %v2128 = vadd.f32 %v2024, %v2127
  %2129 = vmatmul.bf16.gmra.mxu0 %v1017
  %v2130 = vpop.f32.mrf.mxu0
  %v2131 = vadd.f32 %v2027, %v2130
  %v2132 = vpop.f32.mrf.mxu0
  %v2133 = vadd.f32 %v2029, %v2132
  %2134 = vmatmul.bf16.gmra.mxu0 %v1026
  %v2135 = vpop.f32.mrf.mxu0
  %v2136 = vadd.f32 %v2032, %v2135
  %v2137 = vpop.f32.mrf.mxu0
  %v2138 = vadd.f32 %v2034, %v2137
  %2139 = vmatmul.bf16.gmra.mxu0 %v1035
  %v2140 = vpop.f32.mrf.mxu0
  %v2141 = vadd.f32 %v2037, %v2140
  %v2142 = vpop.f32.mrf.mxu0
  %v2143 = vadd.f32 %v2039, %v2142
  %2144 = vmatmul.bf16.gmra.mxu0 %v1044
  %v2145 = vpop.f32.mrf.mxu0
  %v2146 = vadd.f32 %v2042, %v2145
  %v2147 = vpop.f32.mrf.mxu0
  %v2148 = vadd.f32 %v2044, %v2147
  %2149 = vmatmul.bf16.gmra.mxu0 %v1053
  %v2150 = vpop.f32.mrf.mxu0
  %v2151 = vadd.f32 %v2047, %v2150
  %v2152 = vpop.f32.mrf.mxu0
  %v2153 = vadd.f32 %v2049, %v2152
  %2154 = vmatmul.bf16.gmra.mxu0 %v1062
  %v2155 = vpop.f32.mrf.mxu0
  %v2156 = vadd.f32 %v2052, %v2155
  %v2157 = vpop.f32.mrf.mxu0
  %v2158 = vadd.f32 %v2054, %v2157
  %2159 = vmatmul.bf16.gmra.mxu0 %v1071
  %v2160 = vpop.f32.mrf.mxu0
  %v2161 = vadd.f32 %v2057, %v2160
  %v2162 = vpop.f32.mrf.mxu0
  %v2163 = vadd.f32 %v2059, %v2162
  %2164 = vmatmul.bf16.gmra.mxu0 %v1080
  %v2165 = vpop.f32.mrf.mxu0
  %v2166 = vadd.f32 %v2062, %v2165
  %v2167 = vpop.f32.mrf.mxu0
  %v2168 = vadd.f32 %v2064, %v2167
  %2169 = vdwg.mxu0
  %2170 = vmatpush.bf16.msra.mxu0 0
  %2171 = vmatpush.bf16.msra.mxu0 0
  %2172 = vmatpush.bf16.msra.mxu0 0
  %2173 = vmatpush.bf16.msra.mxu0 0
  %2174 = vmatpush.bf16.msra.mxu0 0
  %2175 = vmatpush.bf16.msra.mxu0 0
  %2176 = vmatpush.bf16.msra.mxu0 %v1279
  %2177 = vmatpush.bf16.msra.mxu0 %v1278
  %2178 = vmatmul.bf16.gmra.mxu0 %v1282
  %v2179 = vpop.f32.mrf.mxu0
  %v2180 = vadd.f32 %v2076, %v2179
  %v2181 = vpop.f32.mrf.mxu0
  %v2182 = vadd.f32 %v2078, %v2181
  %2183 = vmatmul.bf16.gmra.mxu0 %v1285
  %v2184 = vpop.f32.mrf.mxu0
  %v2185 = vadd.f32 %v2081, %v2184
  %v2186 = vpop.f32.mrf.mxu0
  %v2187 = vadd.f32 %v2083, %v2186
  %2188 = vmatmul.bf16.gmra.mxu0 %v1288
  %v2189 = vpop.f32.mrf.mxu0
  %v2190 = vadd.f32 %v2086, %v2189
  %v2191 = vpop.f32.mrf.mxu0
  %v2192 = vadd.f32 %v2088, %v2191
  %2193 = vmatmul.bf16.gmra.mxu0 %v1291
  %v2194 = vpop.f32.mrf.mxu0
  %v2195 = vadd.f32 %v2091, %v2194
  %v2196 = vpop.f32.mrf.mxu0
  %v2197 = vadd.f32 %v2093, %v2196
  %2198 = vmatmul.bf16.gmra.mxu0 %v1294
  %v2199 = vpop.f32.mrf.mxu0
  %v2200 = vadd.f32 %v2096, %v2199
  %v2201 = vpop.f32.mrf.mxu0
  %v2202 = vadd.f32 %v2098, %v2201
  %2203 = vmatmul.bf16.gmra.mxu0 %v1297
  %v2204 = vpop.f32.mrf.mxu0
  %v2205 = vadd.f32 %v2101, %v2204
  %v2206 = vpop.f32.mrf.mxu0
  %v2207 = vadd.f32 %v2103, %v2206
  %2208 = vmatmul.bf16.gmra.mxu0 %v1300
  %v2209 = vpop.f32.mrf.mxu0
  %v2210 = vadd.f32 %v2106, %v2209
  %v2211 = vpop.f32.mrf.mxu0
  %v2212 = vadd.f32 %v2108, %v2211
  %2213 = vmatmul.bf16.gmra.mxu0 %v1303
  %v2214 = vpop.f32.mrf.mxu0
  %v2215 = vadd.f32 %v2111, %v2214
  %v2216 = vpop.f32.mrf.mxu0
  %v2217 = vadd.f32 %v2113, %v2216
  %2218 = vmatmul.bf16.gmra.mxu0 %v1306
  %v2219 = vpop.f32.mrf.mxu0
  %v2220 = vadd.f32 %v2116, %v2219
  %v2221 = vpop.f32.mrf.mxu0
  %v2222 = vadd.f32 %v2118, %v2221
  %2223 = vmatmul.bf16.gmra.mxu0 %v1309
  %v2224 = vpop.f32.mrf.mxu0
  %v2225 = vadd.f32 %v2121, %v2224
  %v2226 = vpop.f32.mrf.mxu0
  %v2227 = vadd.f32 %v2123, %v2226
  %2228 = vmatmul.bf16.gmra.mxu0 %v1312
  %v2229 = vpop.f32.mrf.mxu0
  %v2230 = vadd.f32 %v2126, %v2229
  %v2231 = vpop.f32.mrf.mxu0
  %v2232 = vadd.f32 %v2128, %v2231
  %2233 = vmatmul.bf16.gmra.mxu0 %v1315
  %v2234 = vpop.f32.mrf.mxu0
  %v2235 = vadd.f32 %v2131, %v2234
  %v2236 = vpop.f32.mrf.mxu0
  %v2237 = vadd.f32 %v2133, %v2236
  %2238 = vmatmul.bf16.gmra.mxu0 %v1318
  %v2239 = vpop.f32.mrf.mxu0
  %v2240 = vadd.f32 %v2136, %v2239
  %v2241 = vpop.f32.mrf.mxu0
  %v2242 = vadd.f32 %v2138, %v2241
  %2243 = vmatmul.bf16.gmra.mxu0 %v1321
  %v2244 = vpop.f32.mrf.mxu0
  %v2245 = vadd.f32 %v2141, %v2244
  %v2246 = vpop.f32.mrf.mxu0
  %v2247 = vadd.f32 %v2143, %v2246
  %2248 = vmatmul.bf16.gmra.mxu0 %v1324
  %v2249 = vpop.f32.mrf.mxu0
  %v2250 = vadd.f32 %v2146, %v2249
  %v2251 = vpop.f32.mrf.mxu0
  %v2252 = vadd.f32 %v2148, %v2251
  %2253 = vmatmul.bf16.gmra.mxu0 %v1327
  %v2254 = vpop.f32.mrf.mxu0
  %v2255 = vadd.f32 %v2151, %v2254
  %v2256 = vpop.f32.mrf.mxu0
  %v2257 = vadd.f32 %v2153, %v2256
  %2258 = vmatmul.bf16.gmra.mxu0 %v1330
  %v2259 = vpop.f32.mrf.mxu0
  %v2260 = vadd.f32 %v2156, %v2259
  %v2261 = vpop.f32.mrf.mxu0
  %v2262 = vadd.f32 %v2158, %v2261
  %2263 = vmatmul.bf16.gmra.mxu0 %v1333
  %v2264 = vpop.f32.mrf.mxu0
  %v2265 = vadd.f32 %v2161, %v2264
  %v2266 = vpop.f32.mrf.mxu0
  %v2267 = vadd.f32 %v2163, %v2266
  %2268 = vmatmul.bf16.gmra.mxu0 %v1336
  %v2269 = vpop.f32.mrf.mxu0
  %v2270 = vadd.f32 %v2166, %v2269
  %v2271 = vpop.f32.mrf.mxu0
  %v2272 = vadd.f32 %v2168, %v2271
  %2273 = vdwg.mxu0
  %vm2274 = vcmask 400384
  %2275 = vst.msk [vmem:[%s3] sm:$0xff] %vm2274, %v2180
  %2276 = vst.msk [vmem:[%s3 + $0x8] sm:$0xff] %vm2274, %v2182
  %2277 = vst.msk [vmem:[%s3 + $0x10] sm:$0xff] %vm2274, %v2185
  %2278 = vst.msk [vmem:[%s3 + $0x18] sm:$0xff] %vm2274, %v2187
  %2279 = vst.msk [vmem:[%s3 + $0x20] sm:$0xff] %vm2274, %v2190
  %2280 = vst.msk [vmem:[%s3 + $0x28] sm:$0xff] %vm2274, %v2192
  %2281 = vst.msk [vmem:[%s3 + $0x30] sm:$0xff] %vm2274, %v2195
  %2282 = vst.msk [vmem:[%s3 + $0x38] sm:$0xff] %vm2274, %v2197
  %2283 = vst.msk [vmem:[%s3 + $0x40] sm:$0xff] %vm2274, %v2200
  %2284 = vst.msk [vmem:[%s3 + $0x48] sm:$0xff] %vm2274, %v2202
  %2285 = vst.msk [vmem:[%s3 + $0x50] sm:$0xff] %vm2274, %v2205
  %2286 = vst.msk [vmem:[%s3 + $0x58] sm:$0xff] %vm2274, %v2207
  %2287 = vst.msk [vmem:[%s3 + $0x60] sm:$0xff] %vm2274, %v2210
  %2288 = vst.msk [vmem:[%s3 + $0x68] sm:$0xff] %vm2274, %v2212
  %2289 = vst.msk [vmem:[%s3 + $0x70] sm:$0xff] %vm2274, %v2215
  %2290 = vst.msk [vmem:[%s3 + $0x78] sm:$0xff] %vm2274, %v2217
  %2291 = vst.msk [vmem:[%s3 + $0x80] sm:$0xff] %vm2274, %v2220
  %2292 = vst.msk [vmem:[%s3 + $0x88] sm:$0xff] %vm2274, %v2222
  %2293 = vst.msk [vmem:[%s3 + $0x90] sm:$0xff] %vm2274, %v2225
  %2294 = vst.msk [vmem:[%s3 + $0x98] sm:$0xff] %vm2274, %v2227
  %2295 = vst.msk [vmem:[%s3 + $0xa0] sm:$0xff] %vm2274, %v2230
  %2296 = vst.msk [vmem:[%s3 + $0xa8] sm:$0xff] %vm2274, %v2232
  %2297 = vst.msk [vmem:[%s3 + $0xb0] sm:$0xff] %vm2274, %v2235
  %2298 = vst.msk [vmem:[%s3 + $0xb8] sm:$0xff] %vm2274, %v2237
  %2299 = vst.msk [vmem:[%s3 + $0xc0] sm:$0xff] %vm2274, %v2240
  %2300 = vst.msk [vmem:[%s3 + $0xc8] sm:$0xff] %vm2274, %v2242
  %2301 = vst.msk [vmem:[%s3 + $0xd0] sm:$0xff] %vm2274, %v2245
  %2302 = vst.msk [vmem:[%s3 + $0xd8] sm:$0xff] %vm2274, %v2247
  %2303 = vst.msk [vmem:[%s3 + $0xe0] sm:$0xff] %vm2274, %v2250
  %2304 = vst.msk [vmem:[%s3 + $0xe8] sm:$0xff] %vm2274, %v2252
  %2305 = vst.msk [vmem:[%s3 + $0xf0] sm:$0xff] %vm2274, %v2255
  %2306 = vst.msk [vmem:[%s3 + $0xf8] sm:$0xff] %vm2274, %v2257
  %2307 = vst.msk [vmem:[%s3 + $0x100] sm:$0xff] %vm2274, %v2260
  %2308 = vst.msk [vmem:[%s3 + $0x108] sm:$0xff] %vm2274, %v2262
  %2309 = vst.msk [vmem:[%s3 + $0x110] sm:$0xff] %vm2274, %v2265
  %2310 = vst.msk [vmem:[%s3 + $0x118] sm:$0xff] %vm2274, %v2267
  %2311 = vst.msk [vmem:[%s3 + $0x120] sm:$0xff] %vm2274, %v2270
  %2312 = vst.msk [vmem:[%s3 + $0x128] sm:$0xff] %vm2274, %v2272
  // Predicated region
  $region14: #{tpu_custom_call.1} parent=0 // pred_check
    _
  $region15: #{tpu_custom_call.1} parent=0 // pred_check_branch
    %2314 = sbr.rel (0) target = $region17
  $region16: #{tpu_custom_call.1} parent=0 // pred_region
    _
  $region17: #{tpu_custom_call.1} parent=0 // pred_fallthru
    _
  // Predicated region
  $region18: #{tpu_custom_call.1} parent=0 // pred_check
    _
  $region19: #{tpu_custom_call.1} parent=0 // pred_check_branch
    %2316 = sbr.rel (0) target = $region21
  $region20: #{tpu_custom_call.1} parent=0 // pred_region
    _
  $region21: #{tpu_custom_call.1} parent=0 // pred_fallthru
    _

</llo_original>
